<compile_context>
chip_gen: v5e
topology: v5e:2x2
jax: 0.10.0
libtpu: 0.0.40
codegen_flags: <defaults>
</compile_context>

<pallas_src>
import jax
import jax.numpy as jnp
from jax.experimental import pallas as pl
from jax.experimental.pallas import tpu as pltpu


# ----------------------------- config ---------------------------------------
class Config:
    embedding_dim = 128
    input_dropout = 0.2  # unused at inference (identity)


# ----------------------------- kernel ---------------------------------------
def complex_lit_kernel(p_ref,                             # (bm, 2D)  [p_real|p_img]
                       ent_real_ref, ent_img_ref,         # (bn, D)   entity tiles
                       lit_ref,                           # (bn, n_lit)
                       w_er_ref, w_ei_ref,                # (D, D)    gate weights
                       w_lrli_ref,                        # (n_lit, 2D) [w_lr|w_li]
                       b_ref,                             # (1, 2D)   [b_r|b_i] f32
                       out_ref,                           # (bm, bn)  scores (bf16)
                       e2_ref):                           # (bn, 2D)  scratch (bf16)
    d = w_er_ref.shape[0]

    # Literal gate, computed ONCE per entity tile (batch axis is the inner,
    # "arbitrary" grid axis; e2 is cached in VMEM scratch across it).
    @pl.when(pl.program_id(1) == 0)
    def _():
        # Single K=n_lit matmul for both real/img literal halves, plus bias.
        lit_pre = (jnp.dot(lit_ref[...], w_lrli_ref[...],
                           preferred_element_type=jnp.float32) + b_ref[...])
        g_real = jnp.tanh(
            jnp.dot(ent_real_ref[...], w_er_ref[...],
                    preferred_element_type=jnp.float32) + lit_pre[:, :d])
        g_img = jnp.tanh(
            jnp.dot(ent_img_ref[...], w_ei_ref[...],
                    preferred_element_type=jnp.float32) + lit_pre[:, d:])
        e2_ref[:, :d] = g_real.astype(e2_ref.dtype)
        e2_ref[:, d:] = g_img.astype(e2_ref.dtype)

    # Fused ComplEx score: one K=2D contraction (contract dim 1 of both
    # operands -> NT matmul, no in-kernel transpose of the (bn, 2D) tile).
    dn = (((1,), (1,)), ((), ()))
    logits = jax.lax.dot_general(p_ref[...], e2_ref[...], dn,
                                 preferred_element_type=jnp.float32)

    # Exact sigmoid epilogue (exp on EUP + true divide); bf16 store.
    out_ref[...] = (1.0 / (1.0 + jnp.exp(-logits))).astype(out_ref.dtype)


def complex_literal_scores(p, ent_real, ent_img, lits,
                           w_er, w_ei, w_lrli, b,
                           *, bm=None, bn=None, out_dtype=jnp.bfloat16):
    """p: (B, 2D) = [p_real|p_img]; ent_*: (N, D); lits: (N, n_lit) -> (B, N)."""
    B, twoD = p.shape
    D = twoD // 2
    N = ent_real.shape[0]
    n_lit = lits.shape[1]

    if bm is None:
        bm = min(B, 512)            # amortize per-step overhead
    if bn is None:
        bn = min(N, 2048)           # big lane-dense entity / output tiles
    assert B % bm == 0 and N % bn == 0   # TODO(synk): pad + mask remainders
    assert D % 128 == 0

    # Entity axis OUTER (parallel -> megacore shards entity streams);
    # batch axis INNER (arbitrary -> e2 scratch carried across it).
    grid = (N // bn, B // bm)

    p_spec = pl.BlockSpec((bm, twoD), lambda i, j: (j, 0))
    ent_spec = pl.BlockSpec((bn, D), lambda i, j: (i, 0))
    lit_spec = pl.BlockSpec((bn, n_lit), lambda i, j: (i, 0))
    w_emb_spec = pl.BlockSpec((D, D), lambda i, j: (0, 0))      # resident
    w_lit_spec = pl.BlockSpec((n_lit, twoD), lambda i, j: (0, 0))
    bias_spec = pl.BlockSpec((1, twoD), lambda i, j: (0, 0))

    return pl.pallas_call(
        complex_lit_kernel,
        out_shape=jax.ShapeDtypeStruct((B, N), out_dtype),
        grid_spec=pltpu.PrefetchScalarGridSpec(
            num_scalar_prefetch=0,
            grid=grid,
            in_specs=[p_spec,
                      ent_spec, ent_spec, lit_spec,
                      w_emb_spec, w_emb_spec, w_lit_spec, bias_spec],
            out_specs=pl.BlockSpec((bm, bn), lambda i, j: (j, i)),
            scratch_shapes=[pltpu.VMEM((bn, twoD), p.dtype)],
        ),
        compiler_params=pltpu.CompilerParams(
            dimension_semantics=("parallel", "arbitrary"),
            vmem_limit_bytes=32 * 1024 * 1024),
    )(p, ent_real, ent_img, lits, w_er, w_ei, w_lrli, b)


# ----------------------------- forward (glue + kernel) ----------------------
def complex_literal_forward(e1, rel, params, *, compute_dtype=jnp.bfloat16,
                            out_dtype=jnp.bfloat16):
    (emb_e_real, emb_e_img, emb_rel_real, emb_rel_img,
     w_real, b_real, w_img, b_img, lits) = params
    D = Config.embedding_dim

    # ---- batch-side glue (B rows; plain JAX, f32) ---------------------------
    e1_idx = e1.reshape(-1)
    rel_idx = rel.reshape(-1)
    e1_r = jnp.take(emb_e_real, e1_idx, axis=0)
    e1_i = jnp.take(emb_e_img, e1_idx, axis=0)
    rel_r = jnp.take(emb_rel_real, rel_idx, axis=0)
    rel_i = jnp.take(emb_rel_img, rel_idx, axis=0)
    e1_lit = jnp.take(lits, e1_idx, axis=0)

    e1_r = jnp.tanh(jnp.concatenate([e1_r, e1_lit], axis=1) @ w_real + b_real)
    e1_i = jnp.tanh(jnp.concatenate([e1_i, e1_lit], axis=1) @ w_img + b_img)

    # inference-time dropout == identity
    # TODO(synk): training-mode dropout (Config.input_dropout) not implemented.

    # Fold the 4 ComplEx matmuls into one K=2D contraction:
    #   logits = p_real @ e2r^T + p_img @ e2i^T  ==  [p_real|p_img] @ [e2r|e2i]^T
    p_real = e1_r * rel_r - e1_i * rel_i
    p_img = e1_r * rel_i + e1_i * rel_r
    p = jnp.concatenate([p_real, p_img], axis=1)            # (B, 2D)

    # Split literal-gate weights: embedding halves stay separate (different
    # inputs), literal halves are fused into one (n_lit, 2D) operand.
    w_er, w_lr = w_real[:D], w_real[D:]
    w_ei, w_li = w_img[:D], w_img[D:]
    w_lrli = jnp.concatenate([w_lr, w_li], axis=1)           # (n_lit, 2D)
    b = jnp.concatenate([b_real, b_img]).reshape(1, 2 * D).astype(jnp.float32)

    cast = lambda x: x.astype(compute_dtype)
    return complex_literal_scores(
        cast(p),
        cast(emb_e_real), cast(emb_e_img), cast(lits),
        cast(w_er), cast(w_ei), cast(w_lrli), b,
        out_dtype=out_dtype)


# ----------------------------- reference (pure JAX, f32) ---------------------
def reference_forward(e1, rel, params):
    (emb_e_real, emb_e_img, emb_rel_real, emb_rel_img,
     w_real, b_real, w_img, b_img, lits) = params
    e1_idx = e1.reshape(-1)
    rel_idx = rel.reshape(-1)
    e1_r = jnp.take(emb_e_real, e1_idx, axis=0)
    e1_i = jnp.take(emb_e_img, e1_idx, axis=0)
    rel_r = jnp.take(emb_rel_real, rel_idx, axis=0)
    rel_i = jnp.take(emb_rel_img, rel_idx, axis=0)
    e1_lit = jnp.take(lits, e1_idx, axis=0)
    e1_r = jnp.tanh(jnp.concatenate([e1_r, e1_lit], 1) @ w_real + b_real)
    e1_i = jnp.tanh(jnp.concatenate([e1_i, e1_lit], 1) @ w_img + b_img)
    e2_r = jnp.tanh(jnp.concatenate([emb_e_real, lits], 1) @ w_real + b_real)
    e2_i = jnp.tanh(jnp.concatenate([emb_e_img, lits], 1) @ w_img + b_img)
    rrr = (e1_r * rel_r) @ e2_r.T
    rii = (e1_r * rel_i) @ e2_i.T
    iri = (e1_i * rel_r) @ e2_i.T
    iir = (e1_i * rel_i) @ e2_r.T
    return jax.nn.sigmoid(rrr + rii + iri - iir)


# ----------------------------- parameter init --------------------------------
def xavier_normal(key, shape):
    fan_out, fan_in = shape  # nn.Embedding weight: (num_embeddings, dim)
    std = (2.0 / (fan_in + fan_out)) ** 0.5
    return std * jax.random.normal(key, shape, dtype=jnp.float32)


def init_params(key, num_entities, num_relations, dim, n_lit):
    ks = jax.random.split(key, 7)
    emb_e_real = xavier_normal(ks[0], (num_entities, dim)).at[0].set(0.0)
    emb_e_img = xavier_normal(ks[1], (num_entities, dim)).at[0].set(0.0)
    emb_rel_real = xavier_normal(ks[2], (num_relations, dim)).at[0].set(0.0)
    emb_rel_img = xavier_normal(ks[3], (num_relations, dim)).at[0].set(0.0)
    # literal-gate Linear params, stored pre-transposed as (dim + n_lit, dim)
    lim = (6.0 / (2 * dim + n_lit)) ** 0.5
    w_real = jax.random.uniform(ks[4], (dim + n_lit, dim), jnp.float32, -lim, lim)
    w_img = jax.random.uniform(ks[5], (dim + n_lit, dim), jnp.float32, -lim, lim)
    b_real = jnp.zeros((dim,), jnp.float32)
    b_img = jnp.zeros((dim,), jnp.float32)
    lits = jax.random.uniform(ks[6], (num_entities, n_lit), jnp.float32)
    return (emb_e_real, emb_e_img, emb_rel_real, emb_rel_img,
            w_real, b_real, w_img, b_img, lits)


# ------------------------------ main -----------------------------------------
if __name__ == "__main__":
    num_entities = 256
    num_relations = 32
    n_lit = 16
    dim = Config.embedding_dim
    batch = 8

    key = jax.random.PRNGKey(0)
    kp, ke, kr = jax.random.split(key, 3)
    params = init_params(kp, num_entities, num_relations, dim, n_lit)

    # index inputs (as in the PyTorch module: e1 and rel are id tensors)
    e1 = jax.random.randint(ke, (batch, 1), 0, num_entities, dtype=jnp.int32)
    rel = jax.random.randint(kr, (batch, 1), 0, num_relations, dtype=jnp.int32)

    pred = complex_literal_forward(e1, rel, params)
    pred = jax.block_until_ready(pred)

    ref = reference_forward(e1, rel, params)
    assert pred.shape == (batch, num_entities)
    # bf16 streaming + bf16 score output -> loose absolute tolerance
    err = jnp.max(jnp.abs(pred.astype(jnp.float32) - ref))
    assert jnp.allclose(pred.astype(jnp.float32), ref, atol=2e-2, rtol=0.0), float(err)

    print("KERNEL_OK")
</pallas_src>

<mosaic_0001>
module attributes {stable_mosaic.version = 11 : i64} {
  func.func @complex_lit_kernel(%arg0: i32, %arg1: i32, %arg2: memref<8x256xbf16, #tpu.memory_space<vmem>>, %arg3: memref<256x128xbf16, #tpu.memory_space<vmem>>, %arg4: memref<256x128xbf16, #tpu.memory_space<vmem>>, %arg5: memref<256x16xbf16, #tpu.memory_space<vmem>>, %arg6: memref<128x128xbf16, #tpu.memory_space<vmem>>, %arg7: memref<128x128xbf16, #tpu.memory_space<vmem>>, %arg8: memref<16x256xbf16, #tpu.memory_space<vmem>>, %arg9: memref<1x256xf32, #tpu.memory_space<vmem>>, %arg10: memref<8x256xbf16, #tpu.memory_space<vmem>>, %arg11: memref<256x256xbf16, #tpu.memory_space<vmem>>) attributes {dimension_semantics = [#tpu.dimension_semantics<parallel>, #tpu.dimension_semantics<arbitrary>], iteration_bounds = array<i64: 1, 1>, scalar_prefetch = 0 : i64, scratch_operands = 1 : i64, tpu.core_type = #tpu.core_type<tc>, window_params = [{transform_indices = @transform_0, window_bounds = array<i64: 8, 256>}, {transform_indices = @transform_1, window_bounds = array<i64: 256, 128>}, {transform_indices = @transform_2, window_bounds = array<i64: 256, 128>}, {transform_indices = @transform_3, window_bounds = array<i64: 256, 16>}, {pipeline_mode = #tpu.pipeline_mode<synchronous>, transform_indices = @transform_4, window_bounds = array<i64: 128, 128>}, {pipeline_mode = #tpu.pipeline_mode<synchronous>, transform_indices = @transform_5, window_bounds = array<i64: 128, 128>}, {pipeline_mode = #tpu.pipeline_mode<synchronous>, transform_indices = @transform_6, window_bounds = array<i64: 16, 256>}, {pipeline_mode = #tpu.pipeline_mode<synchronous>, transform_indices = @transform_7, window_bounds = array<i64: 1, 256>}, {transform_indices = @transform_8, window_bounds = array<i64: 8, 256>}]} {
    %c0_i32 = arith.constant 0 : i32
    %0 = arith.cmpi eq, %arg1, %c0_i32 : i32
    %1 = arith.extui %0 : i1 to i32
    %c0_i32_0 = arith.constant 0 : i32
    %2 = arith.cmpi ne, %1, %c0_i32_0 : i32
    scf.if %2 {
      %c0_9 = arith.constant 0 : index
      %c0_10 = arith.constant 0 : index
      %15 = vector.load %arg5[%c0_9, %c0_10] : memref<256x16xbf16, #tpu.memory_space<vmem>>, vector<256x16xbf16>
      %c0_11 = arith.constant 0 : index
      %c0_12 = arith.constant 0 : index
      %16 = vector.load %arg8[%c0_11, %c0_12] : memref<16x256xbf16, #tpu.memory_space<vmem>>, vector<16x256xbf16>
      %cst_13 = arith.constant dense<0.000000e+00> : vector<256x256xf32>
      %17 = tpu.matmul %15, %16, %cst_13 {dimension_numbers = #tpu.dot_dimension_numbers<[1], [0], [0], [1], [0, 0, 1, 1], [], []>} : vector<256x16xbf16>, vector<16x256xbf16>, vector<256x256xf32> -> vector<256x256xf32>
      %c0_14 = arith.constant 0 : index
      %c0_15 = arith.constant 0 : index
      %18 = vector.load %arg9[%c0_14, %c0_15] : memref<1x256xf32, #tpu.memory_space<vmem>>, vector<1x256xf32>
      %19 = vector.broadcast %18 : vector<1x256xf32> to vector<256x256xf32>
      %20 = arith.addf %17, %19 : vector<256x256xf32>
      %c0_16 = arith.constant 0 : index
      %c0_17 = arith.constant 0 : index
      %21 = vector.load %arg3[%c0_16, %c0_17] : memref<256x128xbf16, #tpu.memory_space<vmem>>, vector<256x128xbf16>
      %c0_18 = arith.constant 0 : index
      %c0_19 = arith.constant 0 : index
      %22 = vector.load %arg6[%c0_18, %c0_19] : memref<128x128xbf16, #tpu.memory_space<vmem>>, vector<128x128xbf16>
      %cst_20 = arith.constant dense<0.000000e+00> : vector<256x128xf32>
      %23 = tpu.matmul %21, %22, %cst_20 {dimension_numbers = #tpu.dot_dimension_numbers<[1], [0], [0], [1], [0, 0, 1, 1], [], []>} : vector<256x128xbf16>, vector<128x128xbf16>, vector<256x128xf32> -> vector<256x128xf32>
      %24 = vector.extract_strided_slice %20 {offsets = [0, 0], sizes = [256, 128], strides = [1, 1]} : vector<256x256xf32> to vector<256x128xf32>
      %25 = arith.addf %23, %24 : vector<256x128xf32>
      %26 = math.tanh %25 : vector<256x128xf32>
      %c0_21 = arith.constant 0 : index
      %c0_22 = arith.constant 0 : index
      %27 = vector.load %arg4[%c0_21, %c0_22] : memref<256x128xbf16, #tpu.memory_space<vmem>>, vector<256x128xbf16>
      %c0_23 = arith.constant 0 : index
      %c0_24 = arith.constant 0 : index
      %28 = vector.load %arg7[%c0_23, %c0_24] : memref<128x128xbf16, #tpu.memory_space<vmem>>, vector<128x128xbf16>
      %cst_25 = arith.constant dense<0.000000e+00> : vector<256x128xf32>
      %29 = tpu.matmul %27, %28, %cst_25 {dimension_numbers = #tpu.dot_dimension_numbers<[1], [0], [0], [1], [0, 0, 1, 1], [], []>} : vector<256x128xbf16>, vector<128x128xbf16>, vector<256x128xf32> -> vector<256x128xf32>
      %30 = vector.extract_strided_slice %20 {offsets = [0, 128], sizes = [256, 128], strides = [1, 1]} : vector<256x256xf32> to vector<256x128xf32>
      %31 = arith.addf %29, %30 : vector<256x128xf32>
      %32 = math.tanh %31 : vector<256x128xf32>
      %33 = arith.truncf %26 : vector<256x128xf32> to vector<256x128xbf16>
      %c0_26 = arith.constant 0 : index
      %c0_27 = arith.constant 0 : index
      %34 = vector.load %arg11[%c0_26, %c0_27] : memref<256x256xbf16, #tpu.memory_space<vmem>>, vector<256x128xbf16>
      tpu.vector_store %arg11[%c0_26, %c0_27], %33 {strides = array<i32>} : memref<256x256xbf16, #tpu.memory_space<vmem>>, vector<256x128xbf16>,
      %35 = arith.truncf %32 : vector<256x128xf32> to vector<256x128xbf16>
      %c0_28 = arith.constant 0 : index
      %c128 = arith.constant 128 : index
      %36 = vector.load %arg11[%c0_28, %c128] : memref<256x256xbf16, #tpu.memory_space<vmem>>, vector<256x128xbf16>
      tpu.vector_store %arg11[%c0_28, %c128], %35 {strides = array<i32>} : memref<256x256xbf16, #tpu.memory_space<vmem>>, vector<256x128xbf16>,
    } else {
    }
    %c0 = arith.constant 0 : index
    %c0_1 = arith.constant 0 : index
    %3 = vector.load %arg2[%c0, %c0_1] : memref<8x256xbf16, #tpu.memory_space<vmem>>, vector<8x256xbf16>
    %c0_2 = arith.constant 0 : index
    %c0_3 = arith.constant 0 : index
    %4 = vector.load %arg11[%c0_2, %c0_3] : memref<256x256xbf16, #tpu.memory_space<vmem>>, vector<256x256xbf16>
    %cst = arith.constant dense<0.000000e+00> : vector<8x256xf32>
    %5 = tpu.matmul %3, %4, %cst {dimension_numbers = #tpu.dot_dimension_numbers<[1], [1], [0], [0], [0, 0, 1, 0], [], []>} : vector<8x256xbf16>, vector<256x256xbf16>, vector<8x256xf32> -> vector<8x256xf32>
    %cst_4 = arith.constant 0.000000e+00 : f32
    %6 = vector.broadcast %cst_4 : f32 to vector<8x256xf32>
    %7 = arith.subf %6, %5 : vector<8x256xf32>
    %8 = math.exp %7 : vector<8x256xf32>
    %cst_5 = arith.constant 1.000000e+00 : f32
    %9 = vector.broadcast %cst_5 : f32 to vector<8x256xf32>
    %10 = arith.addf %9, %8 : vector<8x256xf32>
    %cst_6 = arith.constant 1.000000e+00 : f32
    %11 = vector.broadcast %cst_6 : f32 to vector<8x256xf32>
    %12 = arith.divf %11, %10 : vector<8x256xf32>
    %13 = arith.truncf %12 : vector<8x256xf32> to vector<8x256xbf16>
    %c0_7 = arith.constant 0 : index
    %c0_8 = arith.constant 0 : index
    %14 = vector.load %arg10[%c0_7, %c0_8] : memref<8x256xbf16, #tpu.memory_space<vmem>>, vector<8x256xbf16>
    tpu.vector_store %arg10[%c0_7, %c0_8], %13 {strides = array<i32>} : memref<8x256xbf16, #tpu.memory_space<vmem>>, vector<8x256xbf16>,
    return
  }
  func.func @transform_0(%arg0: i32, %arg1: i32) -> (i32, i32) {
    %c0_i32 = arith.constant 0 : i32
    %c0_i32_0 = arith.constant 0 : i32
    return %arg1, %c0_i32 : i32, i32
  }
  func.func @transform_1(%arg0: i32, %arg1: i32) -> (i32, i32) {
    %c0_i32 = arith.constant 0 : i32
    %c0_i32_0 = arith.constant 0 : i32
    return %arg0, %c0_i32 : i32, i32
  }
  func.func @transform_2(%arg0: i32, %arg1: i32) -> (i32, i32) {
    %c0_i32 = arith.constant 0 : i32
    %c0_i32_0 = arith.constant 0 : i32
    return %arg0, %c0_i32 : i32, i32
  }
  func.func @transform_3(%arg0: i32, %arg1: i32) -> (i32, i32) {
    %c0_i32 = arith.constant 0 : i32
    %c0_i32_0 = arith.constant 0 : i32
    return %arg0, %c0_i32 : i32, i32
  }
  func.func @transform_4(%arg0: i32, %arg1: i32) -> (i32, i32) {
    %c0_i32 = arith.constant 0 : i32
    %c0_i32_0 = arith.constant 0 : i32
    %c0_i32_1 = arith.constant 0 : i32
    return %c0_i32, %c0_i32_0 : i32, i32
  }
  func.func @transform_5(%arg0: i32, %arg1: i32) -> (i32, i32) {
    %c0_i32 = arith.constant 0 : i32
    %c0_i32_0 = arith.constant 0 : i32
    %c0_i32_1 = arith.constant 0 : i32
    return %c0_i32, %c0_i32_0 : i32, i32
  }
  func.func @transform_6(%arg0: i32, %arg1: i32) -> (i32, i32) {
    %c0_i32 = arith.constant 0 : i32
    %c0_i32_0 = arith.constant 0 : i32
    %c0_i32_1 = arith.constant 0 : i32
    return %c0_i32, %c0_i32_0 : i32, i32
  }
  func.func @transform_7(%arg0: i32, %arg1: i32) -> (i32, i32) {
    %c0_i32 = arith.constant 0 : i32
    %c0_i32_0 = arith.constant 0 : i32
    %c0_i32_1 = arith.constant 0 : i32
    return %c0_i32, %c0_i32_0 : i32, i32
  }
  func.func @transform_8(%arg0: i32, %arg1: i32) -> (i32, i32) {
    %c0_i32 = arith.constant 0 : i32
    return %arg1, %arg0 : i32, i32
  }
}

</mosaic_0001>

<llo_original>
// kernel: tpu_custom_call.1
$region0: #{tpu_custom_call.1}
  #allocation0 [shape = 'u32[]', space=smem, size = 0x4, offset = 0x4, fixed_abs, tag = 'smem constant byte address 0x4 - core index']
  #allocation1 [shape = 'u32[72,128]{1,0:T(1,128)}', space=vmem, size = 0x9000, scoped, tag = 'internal scratch']
  #allocation2 [shape = 'bf16[256,256]{1,0:T(8,128)(2,1)}', space=vmem, size = 0x20000, scoped, tag = 'scratch operand']
  %s0 = inlined_call_operand.hbm [shape: bf16[8,256], index: 0, kind: input, shape index: {}]
  %s1 = inlined_call_operand.vmem [shape: bf16[256,128], index: 1, kind: input, shape index: {}]
  %s2 = inlined_call_operand.hbm [shape: bf16[256,128], index: 2, kind: input, shape index: {}]
  %s3 = inlined_call_operand.vmem [shape: bf16[256,16], index: 3, kind: input, shape index: {}]
  %s4 = inlined_call_operand.hbm [shape: bf16[128,128], index: 4, kind: input, shape index: {}]
  %s5 = inlined_call_operand.hbm [shape: bf16[128,128], index: 5, kind: input, shape index: {}]
  %s6 = inlined_call_operand.vmem [shape: bf16[16,256], index: 6, kind: input, shape index: {}]
  %s7 = inlined_call_operand.vmem [shape: f32[1,256], index: 7, kind: input, shape index: {}]
  %s8 = inlined_call_operand.hbm [shape: bf16[8,256], index: 8, kind: output, shape index: {}]
  %s9 = sld [smem:[#allocation0]]
  $region62: #{tpu_custom_call.1} parent=0
    _
  %s11 = ssub.s32 1, %s9
  %s12 = scalar_select 0, %s11, %s9
  $region1: #{tpu_custom_call.1} parent=0
    #allocation3 [shape = 'u8[4096]{0}', space=vmem, size = 0x1000, scoped, tag = 'input window, operand 0, single buffered']
    #allocation4 [shape = 's32[1]{0}', space=sflag, size = 0x4, scoped, tag = 'scoped memory for tpu_custom_call.1']
    #allocation5 [shape = 's32[1]{0}', space=sflag, size = 0x4, scoped, tag = 'scoped memory for tpu_custom_call.1']
    #allocation6 [shape = 'u8[65536]{0}', space=vmem, size = 0x10000, scoped, tag = 'input window, operand 2, single buffered']
    #allocation7 [shape = 's32[1]{0}', space=sflag, size = 0x4, scoped, tag = 'scoped memory for tpu_custom_call.1']
    #allocation8 [shape = 'u8[32768]{0}', space=vmem, size = 0x8000, scoped, tag = 'input window, operand 4, single buffered']
    #allocation9 [shape = 'u8[32768]{0}', space=vmem, size = 0x8000, scoped, tag = 'input window, operand 5, single buffered']
    #allocation10 [shape = 's32[1]{0}', space=sflag, size = 0x4, scoped, tag = 'scoped memory for tpu_custom_call.1']
    #allocation11 [shape = 'u8[4096]{0}', space=vmem, size = 0x1000, scoped, tag = 'output window, operand 0, single buffered']
    %13 = vsyncpa [#allocation4], 0
    %14 = vsyncpa [#allocation7], 0
    %15 = vsyncpa [#allocation10], 0
    %16 = vsyncpa [#allocation5], 0
    // Predicated region
    $region2: #{tpu_custom_call.1} parent=1 // pred_check
      _
    $region3: #{tpu_custom_call.1} parent=1 // pred_check_branch
      %18 = sbr.rel (0) target = $region5
    $region4: #{tpu_custom_call.1} parent=1 // pred_region
      %20 = vsyncadd [#allocation4], 0
      %s22 = sshll.u32 %s0, 4
      %s23 = int_to_ptr.hbm [resolvable:$true] %s22
      %s24 = sshll.u32 [#allocation3], 4
      %s25 = int_to_ptr.vmem [resolvable:$true] %s24
      %27 = dma.hbm_to_vmem [thread:$0]  %s23, 128, %s25, [#allocation4]
    $region5: #{tpu_custom_call.1} parent=1 // pred_fallthru
      _
    // Predicated region
    $region6: #{tpu_custom_call.1} parent=1 // pred_check
      _
    $region7: #{tpu_custom_call.1} parent=1 // pred_check_branch
      %29 = sbr.rel (0) target = $region9
    $region8: #{tpu_custom_call.1} parent=1 // pred_region
      _
    $region9: #{tpu_custom_call.1} parent=1 // pred_fallthru
      _
    // Predicated region
    $region10: #{tpu_custom_call.1} parent=1 // pred_check
      _
    $region11: #{tpu_custom_call.1} parent=1 // pred_check_branch
      %31 = sbr.rel (0) target = $region13
    $region12: #{tpu_custom_call.1} parent=1 // pred_region
      %33 = vsyncadd [#allocation7], 0
      %s34 = sshll.u32 %s2, 4
      %s35 = int_to_ptr.hbm [resolvable:$true] %s34
      %s36 = sshll.u32 [#allocation6], 4
      %s37 = int_to_ptr.vmem [resolvable:$true] %s36
      %42 = dma.hbm_to_vmem [thread:$0]  %s35, 2048, %s37, [#allocation7], 64, 64, 4
    $region13: #{tpu_custom_call.1} parent=1 // pred_fallthru
      _
    // Predicated region
    $region14: #{tpu_custom_call.1} parent=1 // pred_check
      _
    $region15: #{tpu_custom_call.1} parent=1 // pred_check_branch
      %44 = sbr.rel (0) target = $region17
    $region16: #{tpu_custom_call.1} parent=1 // pred_region
      _
    $region17: #{tpu_custom_call.1} parent=1 // pred_fallthru
      _
    // Predicated region
    $region18: #{tpu_custom_call.1} parent=1 // pred_check
      _
    $region19: #{tpu_custom_call.1} parent=1 // pred_check_branch
      %46 = sbr.rel (0) target = $region21
    $region20: #{tpu_custom_call.1} parent=1 // pred_region
      %48 = vsyncadd [#allocation7], 0
      %s49 = sshll.u32 %s4, 4
      %s50 = int_to_ptr.hbm [resolvable:$true] %s49
      %s51 = sshll.u32 [#allocation8], 4
      %s52 = int_to_ptr.vmem [resolvable:$true] %s51
      %57 = dma.hbm_to_vmem [thread:$0]  %s50, 1024, %s52, [#allocation7], 64, 64, 4
    $region21: #{tpu_custom_call.1} parent=1 // pred_fallthru
      _
    // Predicated region
    $region22: #{tpu_custom_call.1} parent=1 // pred_check
      _
    $region23: #{tpu_custom_call.1} parent=1 // pred_check_branch
      %59 = sbr.rel (0) target = $region25
    $region24: #{tpu_custom_call.1} parent=1 // pred_region
      %61 = vsyncadd [#allocation10], 0
      %s62 = sshll.u32 %s5, 4
      %s63 = int_to_ptr.hbm [resolvable:$true] %s62
      %s64 = sshll.u32 [#allocation9], 4
      %s65 = int_to_ptr.vmem [resolvable:$true] %s64
      %70 = dma.hbm_to_vmem [thread:$0]  %s63, 1024, %s65, [#allocation10], 64, 64, 4
    $region25: #{tpu_custom_call.1} parent=1 // pred_fallthru
      _
    // Predicated region
    $region26: #{tpu_custom_call.1} parent=1 // pred_check
      _
    $region27: #{tpu_custom_call.1} parent=1 // pred_check_branch
      %72 = sbr.rel (0) target = $region29
    $region28: #{tpu_custom_call.1} parent=1 // pred_region
      _
    $region29: #{tpu_custom_call.1} parent=1 // pred_fallthru
      _
    // Predicated region
    $region30: #{tpu_custom_call.1} parent=1 // pred_check
      _
    $region31: #{tpu_custom_call.1} parent=1 // pred_check_branch
      %74 = sbr.rel (0) target = $region33
    $region32: #{tpu_custom_call.1} parent=1 // pred_region
      _
    $region33: #{tpu_custom_call.1} parent=1 // pred_fallthru
      _
    // Predicated region
    $region34: #{tpu_custom_call.1} parent=1 // pred_check
      _
    $region35: #{tpu_custom_call.1} parent=1 // pred_check_branch
      %76 = sbr.rel (0) target = $region37
    $region36: #{tpu_custom_call.1} parent=1 // pred_region
      %78 = dma.done [#allocation4], 128
    $region37: #{tpu_custom_call.1} parent=1 // pred_fallthru
      _
    // Predicated region
    $region38: #{tpu_custom_call.1} parent=1 // pred_check
      _
    $region39: #{tpu_custom_call.1} parent=1 // pred_check_branch
      %80 = sbr.rel (0) target = $region41
    $region40: #{tpu_custom_call.1} parent=1 // pred_region
      %82 = dma.done [#allocation7], 2048
    $region41: #{tpu_custom_call.1} parent=1 // pred_fallthru
      _
    // Predicated region
    $region42: #{tpu_custom_call.1} parent=1 // pred_check
      _
    $region43: #{tpu_custom_call.1} parent=1 // pred_check_branch
      %84 = sbr.rel (0) target = $region45
    $region44: #{tpu_custom_call.1} parent=1 // pred_region
      %86 = dma.done [#allocation7], 1024
    $region45: #{tpu_custom_call.1} parent=1 // pred_fallthru
      _
    // Predicated region
    $region46: #{tpu_custom_call.1} parent=1 // pred_check
      _
    $region47: #{tpu_custom_call.1} parent=1 // pred_check_branch
      %88 = sbr.rel (0) target = $region49
    $region48: #{tpu_custom_call.1} parent=1 // pred_region
      %90 = dma.done [#allocation10], 1024
    $region49: #{tpu_custom_call.1} parent=1 // pred_fallthru
      _
    %p92 = scmp.eq.s32.totalorder 0, 0
    // Predicated region
    $region50: #{tpu_custom_call.1} parent=1 // pred_check
      %p93 = pneg %p92
    $region51: #{tpu_custom_call.1} parent=1 // pred_check_branch
      %95 = sbr.rel (%p93) target = $region53
    $region52: #{tpu_custom_call.1} parent=1 // pred_region
      %v96 = vld [vmem:[%s3] sm:$0xf]
      %v97 = vld [vmem:[%s3 + $0x4] sm:$0xf]
      %v98 = vld [vmem:[%s3 + $0x8] sm:$0xf]
      %v99 = vld [vmem:[%s3 + $0xc] sm:$0xf]
      %v100 = vld [vmem:[%s3 + $0x10] sm:$0xf]
      %v101 = vld [vmem:[%s3 + $0x14] sm:$0xf]
      %v102 = vld [vmem:[%s3 + $0x18] sm:$0xf]
      %v103 = vld [vmem:[%s3 + $0x1c] sm:$0xf]
      %v104 = vld [vmem:[%s3 + $0x20] sm:$0xf]
      %v105 = vld [vmem:[%s3 + $0x24] sm:$0xf]
      %v106 = vld [vmem:[%s3 + $0x28] sm:$0xf]
      %v107 = vld [vmem:[%s3 + $0x2c] sm:$0xf]
      %v108 = vld [vmem:[%s3 + $0x30] sm:$0xf]
      %v109 = vld [vmem:[%s3 + $0x34] sm:$0xf]
      %v110 = vld [vmem:[%s3 + $0x38] sm:$0xf]
      %v111 = vld [vmem:[%s3 + $0x3c] sm:$0xf]
      %v112 = vld [vmem:[%s3 + $0x40] sm:$0xf]
      %v113 = vld [vmem:[%s3 + $0x44] sm:$0xf]
      %v114 = vld [vmem:[%s3 + $0x48] sm:$0xf]
      %v115 = vld [vmem:[%s3 + $0x4c] sm:$0xf]
      %v116 = vld [vmem:[%s3 + $0x50] sm:$0xf]
      %v117 = vld [vmem:[%s3 + $0x54] sm:$0xf]
      %v118 = vld [vmem:[%s3 + $0x58] sm:$0xf]
      %v119 = vld [vmem:[%s3 + $0x5c] sm:$0xf]
      %v120 = vld [vmem:[%s3 + $0x60] sm:$0xf]
      %v121 = vld [vmem:[%s3 + $0x64] sm:$0xf]
      %v122 = vld [vmem:[%s3 + $0x68] sm:$0xf]
      %v123 = vld [vmem:[%s3 + $0x6c] sm:$0xf]
      %v124 = vld [vmem:[%s3 + $0x70] sm:$0xf]
      %v125 = vld [vmem:[%s3 + $0x74] sm:$0xf]
      %v126 = vld [vmem:[%s3 + $0x78] sm:$0xf]
      %v127 = vld [vmem:[%s3 + $0x7c] sm:$0xf]
      %v128 = vld [vmem:[%s6] sm:$0xff]
      %v129 = vld [vmem:[%s6 + $0x8] sm:$0xff]
      %v130 = vld [vmem:[%s7] sm:$0x3]
      %v132 = vperm.slane %v130, 0
      %v133 = vperm.slane %v130, 1
      %v168 = vunpack.c.l.b16 %v96
      %v169 = vunpack.c.l.b16 %v97
      %v170 = vunpack.c.l.b16 %v98
      %v171 = vunpack.c.l.b16 %v99
      %v172 = vunpack.c.l.b16 %v100
      %v173 = vunpack.c.l.b16 %v101
      %v174 = vunpack.c.l.b16 %v102
      %v175 = vunpack.c.l.b16 %v103
      %v176 = vunpack.c.l.b16 %v104
      %v177 = vunpack.c.l.b16 %v105
      %v178 = vunpack.c.l.b16 %v106
      %v179 = vunpack.c.l.b16 %v107
      %v180 = vunpack.c.l.b16 %v108
      %v181 = vunpack.c.l.b16 %v109
      %v182 = vunpack.c.l.b16 %v110
      %v183 = vunpack.c.l.b16 %v111
      %v184 = vunpack.c.l.b16 %v112
      %v185 = vunpack.c.l.b16 %v113
      %v186 = vunpack.c.l.b16 %v114
      %v187 = vunpack.c.l.b16 %v115
      %v188 = vunpack.c.l.b16 %v116
      %v189 = vunpack.c.l.b16 %v117
      %v190 = vunpack.c.l.b16 %v118
      %v191 = vunpack.c.l.b16 %v119
      %v192 = vunpack.c.l.b16 %v120
      %v193 = vunpack.c.l.b16 %v121
      %v194 = vunpack.c.l.b16 %v122
      %v195 = vunpack.c.l.b16 %v123
      %v196 = vunpack.c.l.b16 %v124
      %v197 = vunpack.c.l.b16 %v125
      %v198 = vunpack.c.l.b16 %v126
      %v199 = vunpack.c.l.b16 %v127
      %v200 = vpack.c.b16 %v169, %v168
      %v201 = vpack.c.b16 %v171, %v170
      %v202 = vpack.c.b16 %v173, %v172
      %v203 = vpack.c.b16 %v175, %v174
      %v204 = vpack.c.b16 %v177, %v176
      %v205 = vpack.c.b16 %v179, %v178
      %v206 = vpack.c.b16 %v181, %v180
      %v207 = vpack.c.b16 %v183, %v182
      %v208 = vpack.c.b16 %v185, %v184
      %v209 = vpack.c.b16 %v187, %v186
      %v210 = vpack.c.b16 %v189, %v188
      %v211 = vpack.c.b16 %v191, %v190
      %v212 = vpack.c.b16 %v193, %v192
      %v213 = vpack.c.b16 %v195, %v194
      %v214 = vpack.c.b16 %v197, %v196
      %v215 = vpack.c.b16 %v199, %v198
      %v218 = vunpack.c.l.b16 %v128
      %v219 = vunpack.c.h.b16 %v128
      %v220 = vunpack.c.l.b16 %v129
      %v221 = vunpack.c.h.b16 %v129
      %v222 = vpack.c.b16 %v220, %v218
      %v223 = vpack.c.b16 %v221, %v219
      %vm226 = vcmask 130048
      %v228 = vsel %vm226, %v200, 0
      %v231 = vsel %vm226, %v201, 0
      %v234 = vsel %vm226, %v202, 0
      %v237 = vsel %vm226, %v203, 0
      %v240 = vsel %vm226, %v204, 0
      %v243 = vsel %vm226, %v205, 0
      %v246 = vsel %vm226, %v206, 0
      %v249 = vsel %vm226, %v207, 0
      %v252 = vsel %vm226, %v208, 0
      %v255 = vsel %vm226, %v209, 0
      %v258 = vsel %vm226, %v210, 0
      %v261 = vsel %vm226, %v211, 0
      %v264 = vsel %vm226, %v212, 0
      %v267 = vsel %vm226, %v213, 0
      %v270 = vsel %vm226, %v214, 0
      %v273 = vsel %vm226, %v215, 0
      %275 = vmatpush.bf16.msra.mxu0 0
      %276 = vmatpush.bf16.msra.mxu0 0
      %277 = vmatpush.bf16.msra.mxu0 0
      %278 = vmatpush.bf16.msra.mxu0 0
      %279 = vmatpush.bf16.msra.mxu0 0
      %280 = vmatpush.bf16.msra.mxu0 0
      %281 = vmatpush.bf16.msra.mxu0 0
      %282 = vmatpush.bf16.msra.mxu0 %v222
      %283 = vmatmul.bf16.gmra.mxu0 %v228
      %v284 = vpop.f32.mrf.mxu0
      %v285 = vadd.f32 %v132, %v284
      %v286 = vpop.f32.mrf.mxu0
      %v287 = vadd.f32 %v132, %v286
      %288 = vmatmul.bf16.gmra.mxu0 %v231
      %v289 = vpop.f32.mrf.mxu0
      %v290 = vadd.f32 %v132, %v289
      %v291 = vpop.f32.mrf.mxu0
      %v292 = vadd.f32 %v132, %v291
      %293 = vmatmul.bf16.gmra.mxu0 %v234
      %v294 = vpop.f32.mrf.mxu0
      %v295 = vadd.f32 %v132, %v294
      %v296 = vpop.f32.mrf.mxu0
      %v297 = vadd.f32 %v132, %v296
      %298 = vmatmul.bf16.gmra.mxu0 %v237
      %v299 = vpop.f32.mrf.mxu0
      %v300 = vadd.f32 %v132, %v299
      %v301 = vpop.f32.mrf.mxu0
      %v302 = vadd.f32 %v132, %v301
      %303 = vmatmul.bf16.gmra.mxu0 %v240
      %v304 = vpop.f32.mrf.mxu0
      %v305 = vadd.f32 %v132, %v304
      %v306 = vpop.f32.mrf.mxu0
      %v307 = vadd.f32 %v132, %v306
      %308 = vmatmul.bf16.gmra.mxu0 %v243
      %v309 = vpop.f32.mrf.mxu0
      %v310 = vadd.f32 %v132, %v309
      %v311 = vpop.f32.mrf.mxu0
      %v312 = vadd.f32 %v132, %v311
      %313 = vmatmul.bf16.gmra.mxu0 %v246
      %v314 = vpop.f32.mrf.mxu0
      %v315 = vadd.f32 %v132, %v314
      %v316 = vpop.f32.mrf.mxu0
      %v317 = vadd.f32 %v132, %v316
      %318 = vmatmul.bf16.gmra.mxu0 %v249
      %v319 = vpop.f32.mrf.mxu0
      %v320 = vadd.f32 %v132, %v319
      %v321 = vpop.f32.mrf.mxu0
      %v322 = vadd.f32 %v132, %v321
      %323 = vmatmul.bf16.gmra.mxu0 %v252
      %v324 = vpop.f32.mrf.mxu0
      %v325 = vadd.f32 %v132, %v324
      %v326 = vpop.f32.mrf.mxu0
      %v327 = vadd.f32 %v132, %v326
      %328 = vmatmul.bf16.gmra.mxu0 %v255
      %v329 = vpop.f32.mrf.mxu0
      %v330 = vadd.f32 %v132, %v329
      %v331 = vpop.f32.mrf.mxu0
      %v332 = vadd.f32 %v132, %v331
      %333 = vmatmul.bf16.gmra.mxu0 %v258
      %v334 = vpop.f32.mrf.mxu0
      %v335 = vadd.f32 %v132, %v334
      %v336 = vpop.f32.mrf.mxu0
      %v337 = vadd.f32 %v132, %v336
      %338 = vmatmul.bf16.gmra.mxu0 %v261
      %v339 = vpop.f32.mrf.mxu0
      %v340 = vadd.f32 %v132, %v339
      %v341 = vpop.f32.mrf.mxu0
      %v342 = vadd.f32 %v132, %v341
      %343 = vmatmul.bf16.gmra.mxu0 %v264
      %v344 = vpop.f32.mrf.mxu0
      %v345 = vadd.f32 %v132, %v344
      %v346 = vpop.f32.mrf.mxu0
      %v347 = vadd.f32 %v132, %v346
      %348 = vmatmul.bf16.gmra.mxu0 %v267
      %v349 = vpop.f32.mrf.mxu0
      %v350 = vadd.f32 %v132, %v349
      %v351 = vpop.f32.mrf.mxu0
      %v352 = vadd.f32 %v132, %v351
      %353 = vmatmul.bf16.gmra.mxu0 %v270
      %v354 = vpop.f32.mrf.mxu0
      %v355 = vadd.f32 %v132, %v354
      %v356 = vpop.f32.mrf.mxu0
      %v357 = vadd.f32 %v132, %v356
      %358 = vmatmul.bf16.gmra.mxu0 %v273
      %v359 = vpop.f32.mrf.mxu0
      %v360 = vadd.f32 %v132, %v359
      %v361 = vpop.f32.mrf.mxu0
      %v362 = vadd.f32 %v132, %v361
      %363 = vdwg.mxu0
      %364 = vmatpush.bf16.msra.mxu0 0
      %365 = vmatpush.bf16.msra.mxu0 0
      %366 = vmatpush.bf16.msra.mxu0 0
      %367 = vmatpush.bf16.msra.mxu0 0
      %368 = vmatpush.bf16.msra.mxu0 0
      %369 = vmatpush.bf16.msra.mxu0 0
      %370 = vmatpush.bf16.msra.mxu0 0
      %371 = vmatpush.bf16.msra.mxu0 %v223
      %372 = vmatmul.bf16.gmra.mxu0 %v228
      %v373 = vpop.f32.mrf.mxu0
      %v374 = vadd.f32 %v133, %v373
      %v375 = vpop.f32.mrf.mxu0
      %v376 = vadd.f32 %v133, %v375
      %377 = vmatmul.bf16.gmra.mxu0 %v231
      %v378 = vpop.f32.mrf.mxu0
      %v379 = vadd.f32 %v133, %v378
      %v380 = vpop.f32.mrf.mxu0
      %v381 = vadd.f32 %v133, %v380
      %382 = vmatmul.bf16.gmra.mxu0 %v234
      %v383 = vpop.f32.mrf.mxu0
      %v384 = vadd.f32 %v133, %v383
      %v385 = vpop.f32.mrf.mxu0
      %v386 = vadd.f32 %v133, %v385
      %387 = vmatmul.bf16.gmra.mxu0 %v237
      %v388 = vpop.f32.mrf.mxu0
      %v389 = vadd.f32 %v133, %v388
      %v390 = vpop.f32.mrf.mxu0
      %v391 = vadd.f32 %v133, %v390
      %392 = vmatmul.bf16.gmra.mxu0 %v240
      %v393 = vpop.f32.mrf.mxu0
      %v394 = vadd.f32 %v133, %v393
      %v395 = vpop.f32.mrf.mxu0
      %v396 = vadd.f32 %v133, %v395
      %397 = vmatmul.bf16.gmra.mxu0 %v243
      %v398 = vpop.f32.mrf.mxu0
      %v399 = vadd.f32 %v133, %v398
      %v400 = vpop.f32.mrf.mxu0
      %v401 = vadd.f32 %v133, %v400
      %402 = vmatmul.bf16.gmra.mxu0 %v246
      %v403 = vpop.f32.mrf.mxu0
      %v404 = vadd.f32 %v133, %v403
      %v405 = vpop.f32.mrf.mxu0
      %v406 = vadd.f32 %v133, %v405
      %407 = vmatmul.bf16.gmra.mxu0 %v249
      %v408 = vpop.f32.mrf.mxu0
      %v409 = vadd.f32 %v133, %v408
      %v410 = vpop.f32.mrf.mxu0
      %v411 = vadd.f32 %v133, %v410
      %412 = vmatmul.bf16.gmra.mxu0 %v252
      %v413 = vpop.f32.mrf.mxu0
      %v414 = vadd.f32 %v133, %v413
      %v415 = vpop.f32.mrf.mxu0
      %v416 = vadd.f32 %v133, %v415
      %417 = vmatmul.bf16.gmra.mxu0 %v255
      %v418 = vpop.f32.mrf.mxu0
      %v419 = vadd.f32 %v133, %v418
      %v420 = vpop.f32.mrf.mxu0
      %v421 = vadd.f32 %v133, %v420
      %422 = vmatmul.bf16.gmra.mxu0 %v258
      %v423 = vpop.f32.mrf.mxu0
      %v424 = vadd.f32 %v133, %v423
      %v425 = vpop.f32.mrf.mxu0
      %v426 = vadd.f32 %v133, %v425
      %427 = vmatmul.bf16.gmra.mxu0 %v261
      %v428 = vpop.f32.mrf.mxu0
      %v429 = vadd.f32 %v133, %v428
      %v430 = vpop.f32.mrf.mxu0
      %v431 = vadd.f32 %v133, %v430
      %432 = vmatmul.bf16.gmra.mxu0 %v264
      %v433 = vpop.f32.mrf.mxu0
      %v434 = vadd.f32 %v133, %v433
      %v435 = vpop.f32.mrf.mxu0
      %v436 = vadd.f32 %v133, %v435
      %437 = vmatmul.bf16.gmra.mxu0 %v267
      %v438 = vpop.f32.mrf.mxu0
      %v439 = vadd.f32 %v133, %v438
      %v440 = vpop.f32.mrf.mxu0
      %v441 = vadd.f32 %v133, %v440
      %442 = vmatmul.bf16.gmra.mxu0 %v270
      %v443 = vpop.f32.mrf.mxu0
      %v444 = vadd.f32 %v133, %v443
      %v445 = vpop.f32.mrf.mxu0
      %v446 = vadd.f32 %v133, %v445
      %447 = vmatmul.bf16.gmra.mxu0 %v273
      %v448 = vpop.f32.mrf.mxu0
      %v449 = vadd.f32 %v133, %v448
      %v450 = vpop.f32.mrf.mxu0
      %v451 = vadd.f32 %v133, %v450
      %452 = vdwg.mxu0
      %v453 = vld [vmem:[%s1] sm:$0xf]
      %v454 = vld [vmem:[%s1 + $0x4] sm:$0xf]
      %v455 = vld [vmem:[%s1 + $0x8] sm:$0xf]
      %v456 = vld [vmem:[%s1 + $0xc] sm:$0xf]
      %v457 = vld [vmem:[%s1 + $0x10] sm:$0xf]
      %v458 = vld [vmem:[%s1 + $0x14] sm:$0xf]
      %v459 = vld [vmem:[%s1 + $0x18] sm:$0xf]
      %v460 = vld [vmem:[%s1 + $0x1c] sm:$0xf]
      %v461 = vld [vmem:[%s1 + $0x20] sm:$0xf]
      %v462 = vld [vmem:[%s1 + $0x24] sm:$0xf]
      %v463 = vld [vmem:[%s1 + $0x28] sm:$0xf]
      %v464 = vld [vmem:[%s1 + $0x2c] sm:$0xf]
      %v465 = vld [vmem:[%s1 + $0x30] sm:$0xf]
      %v466 = vld [vmem:[%s1 + $0x34] sm:$0xf]
      %v467 = vld [vmem:[%s1 + $0x38] sm:$0xf]
      %v468 = vld [vmem:[%s1 + $0x3c] sm:$0xf]
      %v469 = vld [vmem:[%s1 + $0x40] sm:$0xf]
      %v470 = vld [vmem:[%s1 + $0x44] sm:$0xf]
      %v471 = vld [vmem:[%s1 + $0x48] sm:$0xf]
      %v472 = vld [vmem:[%s1 + $0x4c] sm:$0xf]
      %v473 = vld [vmem:[%s1 + $0x50] sm:$0xf]
      %v474 = vld [vmem:[%s1 + $0x54] sm:$0xf]
      %v475 = vld [vmem:[%s1 + $0x58] sm:$0xf]
      %v476 = vld [vmem:[%s1 + $0x5c] sm:$0xf]
      %v477 = vld [vmem:[%s1 + $0x60] sm:$0xf]
      %v478 = vld [vmem:[%s1 + $0x64] sm:$0xf]
      %v479 = vld [vmem:[%s1 + $0x68] sm:$0xf]
      %v480 = vld [vmem:[%s1 + $0x6c] sm:$0xf]
      %v481 = vld [vmem:[%s1 + $0x70] sm:$0xf]
      %v482 = vld [vmem:[%s1 + $0x74] sm:$0xf]
      %v483 = vld [vmem:[%s1 + $0x78] sm:$0xf]
      %v484 = vld [vmem:[%s1 + $0x7c] sm:$0xf]
      %v485 = vld [vmem:[#allocation8] sm:$0xf]
      %v486 = vld [vmem:[#allocation8 + $0x4] sm:$0xf]
      %v487 = vld [vmem:[#allocation8 + $0x8] sm:$0xf]
      %v488 = vld [vmem:[#allocation8 + $0xc] sm:$0xf]
      %v489 = vld [vmem:[#allocation8 + $0x10] sm:$0xf]
      %v490 = vld [vmem:[#allocation8 + $0x14] sm:$0xf]
      %v491 = vld [vmem:[#allocation8 + $0x18] sm:$0xf]
      %v492 = vld [vmem:[#allocation8 + $0x1c] sm:$0xf]
      %v493 = vld [vmem:[#allocation8 + $0x20] sm:$0xf]
      %v494 = vld [vmem:[#allocation8 + $0x24] sm:$0xf]
      %v495 = vld [vmem:[#allocation8 + $0x28] sm:$0xf]
      %v496 = vld [vmem:[#allocation8 + $0x2c] sm:$0xf]
      %v497 = vld [vmem:[#allocation8 + $0x30] sm:$0xf]
      %v498 = vld [vmem:[#allocation8 + $0x34] sm:$0xf]
      %v499 = vld [vmem:[#allocation8 + $0x38] sm:$0xf]
      %v500 = vld [vmem:[#allocation8 + $0x3c] sm:$0xf]
      %v533 = vunpack.c.l.b16 %v453
      %v534 = vunpack.c.l.b16 %v454
      %v535 = vunpack.c.l.b16 %v455
      %v536 = vunpack.c.l.b16 %v456
      %v537 = vunpack.c.l.b16 %v457
      %v538 = vunpack.c.l.b16 %v458
      %v539 = vunpack.c.l.b16 %v459
      %v540 = vunpack.c.l.b16 %v460
      %v541 = vunpack.c.l.b16 %v461
      %v542 = vunpack.c.l.b16 %v462
      %v543 = vunpack.c.l.b16 %v463
      %v544 = vunpack.c.l.b16 %v464
      %v545 = vunpack.c.l.b16 %v465
      %v546 = vunpack.c.l.b16 %v466
      %v547 = vunpack.c.l.b16 %v467
      %v548 = vunpack.c.l.b16 %v468
      %v549 = vunpack.c.l.b16 %v469
      %v550 = vunpack.c.l.b16 %v470
      %v551 = vunpack.c.l.b16 %v471
      %v552 = vunpack.c.l.b16 %v472
      %v553 = vunpack.c.l.b16 %v473
      %v554 = vunpack.c.l.b16 %v474
      %v555 = vunpack.c.l.b16 %v475
      %v556 = vunpack.c.l.b16 %v476
      %v557 = vunpack.c.l.b16 %v477
      %v558 = vunpack.c.l.b16 %v478
      %v559 = vunpack.c.l.b16 %v479
      %v560 = vunpack.c.l.b16 %v480
      %v561 = vunpack.c.l.b16 %v481
      %v562 = vunpack.c.l.b16 %v482
      %v563 = vunpack.c.l.b16 %v483
      %v564 = vunpack.c.l.b16 %v484
      %v565 = vpack.c.b16 %v534, %v533
      %v566 = vpack.c.b16 %v536, %v535
      %v567 = vpack.c.b16 %v538, %v537
      %v568 = vpack.c.b16 %v540, %v539
      %v569 = vpack.c.b16 %v542, %v541
      %v570 = vpack.c.b16 %v544, %v543
      %v571 = vpack.c.b16 %v546, %v545
      %v572 = vpack.c.b16 %v548, %v547
      %v573 = vpack.c.b16 %v550, %v549
      %v574 = vpack.c.b16 %v552, %v551
      %v575 = vpack.c.b16 %v554, %v553
      %v576 = vpack.c.b16 %v556, %v555
      %v577 = vpack.c.b16 %v558, %v557
      %v578 = vpack.c.b16 %v560, %v559
      %v579 = vpack.c.b16 %v562, %v561
      %v580 = vpack.c.b16 %v564, %v563
      %v613 = vunpack.c.l.b16 %v485
      %v614 = vunpack.c.l.b16 %v486
      %v615 = vunpack.c.l.b16 %v487
      %v616 = vunpack.c.l.b16 %v488
      %v617 = vunpack.c.l.b16 %v489
      %v618 = vunpack.c.l.b16 %v490
      %v619 = vunpack.c.l.b16 %v491
      %v620 = vunpack.c.l.b16 %v492
      %v621 = vunpack.c.l.b16 %v493
      %v622 = vunpack.c.l.b16 %v494
      %v623 = vunpack.c.l.b16 %v495
      %v624 = vunpack.c.l.b16 %v496
      %v625 = vunpack.c.l.b16 %v497
      %v626 = vunpack.c.l.b16 %v498
      %v627 = vunpack.c.l.b16 %v499
      %v628 = vunpack.c.l.b16 %v500
      %v629 = vpack.c.b16 %v614, %v613
      %v630 = vpack.c.b16 %v616, %v615
      %v631 = vpack.c.b16 %v618, %v617
      %v632 = vpack.c.b16 %v620, %v619
      %v633 = vpack.c.b16 %v622, %v621
      %v634 = vpack.c.b16 %v624, %v623
      %v635 = vpack.c.b16 %v626, %v625
      %v636 = vpack.c.b16 %v628, %v627
      %645 = vmatpush.bf16.msra.mxu0 %v636
      %646 = vmatpush.bf16.msra.mxu0 %v635
      %647 = vmatpush.bf16.msra.mxu0 %v634
      %648 = vmatpush.bf16.msra.mxu0 %v633
      %649 = vmatpush.bf16.msra.mxu0 %v632
      %650 = vmatpush.bf16.msra.mxu0 %v631
      %651 = vmatpush.bf16.msra.mxu0 %v630
      %652 = vmatpush.bf16.msra.mxu0 %v629
      %653 = vmatmul.bf16.gmra.mxu0 %v565
      %v654 = vpop.f32.mrf.mxu0
      %v655 = vadd.f32 %v285, %v654
      %v656 = vpop.f32.mrf.mxu0
      %v657 = vadd.f32 %v287, %v656
      %658 = vmatmul.bf16.gmra.mxu0 %v566
      %v659 = vpop.f32.mrf.mxu0
      %v660 = vadd.f32 %v290, %v659
      %v661 = vpop.f32.mrf.mxu0
      %v662 = vadd.f32 %v292, %v661
      %663 = vmatmul.bf16.gmra.mxu0 %v567
      %v664 = vpop.f32.mrf.mxu0
      %v665 = vadd.f32 %v295, %v664
      %v666 = vpop.f32.mrf.mxu0
      %v667 = vadd.f32 %v297, %v666
      %668 = vmatmul.bf16.gmra.mxu0 %v568
      %v669 = vpop.f32.mrf.mxu0
      %v670 = vadd.f32 %v300, %v669
      %v671 = vpop.f32.mrf.mxu0
      %v672 = vadd.f32 %v302, %v671
      %673 = vmatmul.bf16.gmra.mxu0 %v569
      %v674 = vpop.f32.mrf.mxu0
      %v675 = vadd.f32 %v305, %v674
      %v676 = vpop.f32.mrf.mxu0
      %v677 = vadd.f32 %v307, %v676
      %678 = vmatmul.bf16.gmra.mxu0 %v570
      %v679 = vpop.f32.mrf.mxu0
      %v680 = vadd.f32 %v310, %v679
      %v681 = vpop.f32.mrf.mxu0
      %v682 = vadd.f32 %v312, %v681
      %683 = vmatmul.bf16.gmra.mxu0 %v571
      %v684 = vpop.f32.mrf.mxu0
      %v685 = vadd.f32 %v315, %v684
      %v686 = vpop.f32.mrf.mxu0
      %v687 = vadd.f32 %v317, %v686
      %688 = vmatmul.bf16.gmra.mxu0 %v572
      %v689 = vpop.f32.mrf.mxu0
      %v690 = vadd.f32 %v320, %v689
      %v691 = vpop.f32.mrf.mxu0
      %v692 = vadd.f32 %v322, %v691
      %693 = vmatmul.bf16.gmra.mxu0 %v573
      %v694 = vpop.f32.mrf.mxu0
      %v695 = vadd.f32 %v325, %v694
      %v696 = vpop.f32.mrf.mxu0
      %v697 = vadd.f32 %v327, %v696
      %698 = vmatmul.bf16.gmra.mxu0 %v574
      %v699 = vpop.f32.mrf.mxu0
      %v700 = vadd.f32 %v330, %v699
      %v701 = vpop.f32.mrf.mxu0
      %v702 = vadd.f32 %v332, %v701
      %703 = vmatmul.bf16.gmra.mxu0 %v575
      %v704 = vpop.f32.mrf.mxu0
      %v705 = vadd.f32 %v335, %v704
      %v706 = vpop.f32.mrf.mxu0
      %v707 = vadd.f32 %v337, %v706
      %708 = vmatmul.bf16.gmra.mxu0 %v576
      %v709 = vpop.f32.mrf.mxu0
      %v710 = vadd.f32 %v340, %v709
      %v711 = vpop.f32.mrf.mxu0
      %v712 = vadd.f32 %v342, %v711
      %713 = vmatmul.bf16.gmra.mxu0 %v577
      %v714 = vpop.f32.mrf.mxu0
      %v715 = vadd.f32 %v345, %v714
      %v716 = vpop.f32.mrf.mxu0
      %v717 = vadd.f32 %v347, %v716
      %718 = vmatmul.bf16.gmra.mxu0 %v578
      %v719 = vpop.f32.mrf.mxu0
      %v720 = vadd.f32 %v350, %v719
      %v721 = vpop.f32.mrf.mxu0
      %v722 = vadd.f32 %v352, %v721
      %723 = vmatmul.bf16.gmra.mxu0 %v579
      %v724 = vpop.f32.mrf.mxu0
      %v725 = vadd.f32 %v355, %v724
      %v726 = vpop.f32.mrf.mxu0
      %v727 = vadd.f32 %v357, %v726
      %728 = vmatmul.bf16.gmra.mxu0 %v580
      %v729 = vpop.f32.mrf.mxu0
      %v730 = vadd.f32 %v360, %v729
      %v731 = vpop.f32.mrf.mxu0
      %v732 = vadd.f32 %v362, %v731
      %733 = vdwg.mxu0
      %v734 = vtanh.pop %v655
      %v735 = vtanh.pop %v657
      %v736 = vtanh.pop %v660
      %v737 = vtanh.pop %v662
      %v738 = vtanh.pop %v665
      %v739 = vtanh.pop %v667
      %v740 = vtanh.pop %v670
      %v741 = vtanh.pop %v672
      %v742 = vtanh.pop %v675
      %v743 = vtanh.pop %v677
      %v744 = vtanh.pop %v680
      %v745 = vtanh.pop %v682
      %v746 = vtanh.pop %v685
      %v747 = vtanh.pop %v687
      %v748 = vtanh.pop %v690
      %v749 = vtanh.pop %v692
      %v750 = vtanh.pop %v695
      %v751 = vtanh.pop %v697
      %v752 = vtanh.pop %v700
      %v753 = vtanh.pop %v702
      %v754 = vtanh.pop %v705
      %v755 = vtanh.pop %v707
      %v756 = vtanh.pop %v710
      %v757 = vtanh.pop %v712
      %v758 = vtanh.pop %v715
      %v759 = vtanh.pop %v717
      %v760 = vtanh.pop %v720
      %v761 = vtanh.pop %v722
      %v762 = vtanh.pop %v725
      %v763 = vtanh.pop %v727
      %v764 = vtanh.pop %v730
      %v765 = vtanh.pop %v732
      %v766 = vld [vmem:[#allocation6] sm:$0xf]
      %v767 = vld [vmem:[#allocation6 + $0x4] sm:$0xf]
      %v768 = vld [vmem:[#allocation6 + $0x8] sm:$0xf]
      %v769 = vld [vmem:[#allocation6 + $0xc] sm:$0xf]
      %v770 = vld [vmem:[#allocation6 + $0x10] sm:$0xf]
      %v771 = vld [vmem:[#allocation6 + $0x14] sm:$0xf]
      %v772 = vld [vmem:[#allocation6 + $0x18] sm:$0xf]
      %v773 = vld [vmem:[#allocation6 + $0x1c] sm:$0xf]
      %v774 = vld [vmem:[#allocation6 + $0x20] sm:$0xf]
      %v775 = vld [vmem:[#allocation6 + $0x24] sm:$0xf]
      %v776 = vld [vmem:[#allocation6 + $0x28] sm:$0xf]
      %v777 = vld [vmem:[#allocation6 + $0x2c] sm:$0xf]
      %v778 = vld [vmem:[#allocation6 + $0x30] sm:$0xf]
      %v779 = vld [vmem:[#allocation6 + $0x34] sm:$0xf]
      %v780 = vld [vmem:[#allocation6 + $0x38] sm:$0xf]
      %v781 = vld [vmem:[#allocation6 + $0x3c] sm:$0xf]
      %v782 = vld [vmem:[#allocation6 + $0x40] sm:$0xf]
      %v783 = vld [vmem:[#allocation6 + $0x44] sm:$0xf]
      %v784 = vld [vmem:[#allocation6 + $0x48] sm:$0xf]
      %v785 = vld [vmem:[#allocation6 + $0x4c] sm:$0xf]
      %v786 = vld [vmem:[#allocation6 + $0x50] sm:$0xf]
      %v787 = vld [vmem:[#allocation6 + $0x54] sm:$0xf]
      %v788 = vld [vmem:[#allocation6 + $0x58] sm:$0xf]
      %v789 = vld [vmem:[#allocation6 + $0x5c] sm:$0xf]
      %v790 = vld [vmem:[#allocation6 + $0x60] sm:$0xf]
      %v791 = vld [vmem:[#allocation6 + $0x64] sm:$0xf]
      %v792 = vld [vmem:[#allocation6 + $0x68] sm:$0xf]
      %v793 = vld [vmem:[#allocation6 + $0x6c] sm:$0xf]
      %v794 = vld [vmem:[#allocation6 + $0x70] sm:$0xf]
      %v795 = vld [vmem:[#allocation6 + $0x74] sm:$0xf]
      %v796 = vld [vmem:[#allocation6 + $0x78] sm:$0xf]
      %v797 = vld [vmem:[#allocation6 + $0x7c] sm:$0xf]
      %v798 = vld [vmem:[#allocation9] sm:$0xf]
      %v799 = vld [vmem:[#allocation9 + $0x4] sm:$0xf]
      %v800 = vld [vmem:[#allocation9 + $0x8] sm:$0xf]
      %v801 = vld [vmem:[#allocation9 + $0xc] sm:$0xf]
      %v802 = vld [vmem:[#allocation9 + $0x10] sm:$0xf]
      %v803 = vld [vmem:[#allocation9 + $0x14] sm:$0xf]
      %v804 = vld [vmem:[#allocation9 + $0x18] sm:$0xf]
      %v805 = vld [vmem:[#allocation9 + $0x1c] sm:$0xf]
      %v806 = vld [vmem:[#allocation9 + $0x20] sm:$0xf]
      %v807 = vld [vmem:[#allocation9 + $0x24] sm:$0xf]
      %v808 = vld [vmem:[#allocation9 + $0x28] sm:$0xf]
      %v809 = vld [vmem:[#allocation9 + $0x2c] sm:$0xf]
      %v810 = vld [vmem:[#allocation9 + $0x30] sm:$0xf]
      %v811 = vld [vmem:[#allocation9 + $0x34] sm:$0xf]
      %v812 = vld [vmem:[#allocation9 + $0x38] sm:$0xf]
      %v813 = vld [vmem:[#allocation9 + $0x3c] sm:$0xf]
      %v846 = vunpack.c.l.b16 %v766
      %v847 = vunpack.c.l.b16 %v767
      %v848 = vunpack.c.l.b16 %v768
      %v849 = vunpack.c.l.b16 %v769
      %v850 = vunpack.c.l.b16 %v770
      %v851 = vunpack.c.l.b16 %v771
      %v852 = vunpack.c.l.b16 %v772
      %v853 = vunpack.c.l.b16 %v773
      %v854 = vunpack.c.l.b16 %v774
      %v855 = vunpack.c.l.b16 %v775
      %v856 = vunpack.c.l.b16 %v776
      %v857 = vunpack.c.l.b16 %v777
      %v858 = vunpack.c.l.b16 %v778
      %v859 = vunpack.c.l.b16 %v779
      %v860 = vunpack.c.l.b16 %v780
      %v861 = vunpack.c.l.b16 %v781
      %v862 = vunpack.c.l.b16 %v782
      %v863 = vunpack.c.l.b16 %v783
      %v864 = vunpack.c.l.b16 %v784
      %v865 = vunpack.c.l.b16 %v785
      %v866 = vunpack.c.l.b16 %v786
      %v867 = vunpack.c.l.b16 %v787
      %v868 = vunpack.c.l.b16 %v788
      %v869 = vunpack.c.l.b16 %v789
      %v870 = vunpack.c.l.b16 %v790
      %v871 = vunpack.c.l.b16 %v791
      %v872 = vunpack.c.l.b16 %v792
      %v873 = vunpack.c.l.b16 %v793
      %v874 = vunpack.c.l.b16 %v794
      %v875 = vunpack.c.l.b16 %v795
      %v876 = vunpack.c.l.b16 %v796
      %v877 = vunpack.c.l.b16 %v797
      %v878 = vpack.c.b16 %v847, %v846
      %v879 = vpack.c.b16 %v849, %v848
      %v880 = vpack.c.b16 %v851, %v850
      %v881 = vpack.c.b16 %v853, %v852
      %v882 = vpack.c.b16 %v855, %v854
      %v883 = vpack.c.b16 %v857, %v856
      %v884 = vpack.c.b16 %v859, %v858
      %v885 = vpack.c.b16 %v861, %v860
      %v886 = vpack.c.b16 %v863, %v862
      %v887 = vpack.c.b16 %v865, %v864
      %v888 = vpack.c.b16 %v867, %v866
      %v889 = vpack.c.b16 %v869, %v868
      %v890 = vpack.c.b16 %v871, %v870
      %v891 = vpack.c.b16 %v873, %v872
      %v892 = vpack.c.b16 %v875, %v874
      %v893 = vpack.c.b16 %v877, %v876
      %v926 = vunpack.c.l.b16 %v798
      %v927 = vunpack.c.l.b16 %v799
      %v928 = vunpack.c.l.b16 %v800
      %v929 = vunpack.c.l.b16 %v801
      %v930 = vunpack.c.l.b16 %v802
      %v931 = vunpack.c.l.b16 %v803
      %v932 = vunpack.c.l.b16 %v804
      %v933 = vunpack.c.l.b16 %v805
      %v934 = vunpack.c.l.b16 %v806
      %v935 = vunpack.c.l.b16 %v807
      %v936 = vunpack.c.l.b16 %v808
      %v937 = vunpack.c.l.b16 %v809
      %v938 = vunpack.c.l.b16 %v810
      %v939 = vunpack.c.l.b16 %v811
      %v940 = vunpack.c.l.b16 %v812
      %v941 = vunpack.c.l.b16 %v813
      %v942 = vpack.c.b16 %v927, %v926
      %v943 = vpack.c.b16 %v929, %v928
      %v944 = vpack.c.b16 %v931, %v930
      %v945 = vpack.c.b16 %v933, %v932
      %v946 = vpack.c.b16 %v935, %v934
      %v947 = vpack.c.b16 %v937, %v936
      %v948 = vpack.c.b16 %v939, %v938
      %v949 = vpack.c.b16 %v941, %v940
      %958 = vmatpush.bf16.msra.mxu0 %v949
      %959 = vmatpush.bf16.msra.mxu0 %v948
      %960 = vmatpush.bf16.msra.mxu0 %v947
      %961 = vmatpush.bf16.msra.mxu0 %v946
      %962 = vmatpush.bf16.msra.mxu0 %v945
      %963 = vmatpush.bf16.msra.mxu0 %v944
      %964 = vmatpush.bf16.msra.mxu0 %v943
      %965 = vmatpush.bf16.msra.mxu0 %v942
      %966 = vmatmul.bf16.gmra.mxu0 %v878
      %v967 = vpop.f32.mrf.mxu0
      %v968 = vadd.f32 %v374, %v967
      %v969 = vpop.f32.mrf.mxu0
      %v970 = vadd.f32 %v376, %v969
      %971 = vmatmul.bf16.gmra.mxu0 %v879
      %v972 = vpop.f32.mrf.mxu0
      %v973 = vadd.f32 %v379, %v972
      %v974 = vpop.f32.mrf.mxu0
      %v975 = vadd.f32 %v381, %v974
      %976 = vmatmul.bf16.gmra.mxu0 %v880
      %v977 = vpop.f32.mrf.mxu0
      %v978 = vadd.f32 %v384, %v977
      %v979 = vpop.f32.mrf.mxu0
      %v980 = vadd.f32 %v386, %v979
      %981 = vmatmul.bf16.gmra.mxu0 %v881
      %v982 = vpop.f32.mrf.mxu0
      %v983 = vadd.f32 %v389, %v982
      %v984 = vpop.f32.mrf.mxu0
      %v985 = vadd.f32 %v391, %v984
      %986 = vmatmul.bf16.gmra.mxu0 %v882
      %v987 = vpop.f32.mrf.mxu0
      %v988 = vadd.f32 %v394, %v987
      %v989 = vpop.f32.mrf.mxu0
      %v990 = vadd.f32 %v396, %v989
      %991 = vmatmul.bf16.gmra.mxu0 %v883
      %v992 = vpop.f32.mrf.mxu0
      %v993 = vadd.f32 %v399, %v992
      %v994 = vpop.f32.mrf.mxu0
      %v995 = vadd.f32 %v401, %v994
      %996 = vmatmul.bf16.gmra.mxu0 %v884
      %v997 = vpop.f32.mrf.mxu0
      %v998 = vadd.f32 %v404, %v997
      %v999 = vpop.f32.mrf.mxu0
      %v1000 = vadd.f32 %v406, %v999
      %1001 = vmatmul.bf16.gmra.mxu0 %v885
      %v1002 = vpop.f32.mrf.mxu0
      %v1003 = vadd.f32 %v409, %v1002
      %v1004 = vpop.f32.mrf.mxu0
      %v1005 = vadd.f32 %v411, %v1004
      %1006 = vmatmul.bf16.gmra.mxu0 %v886
      %v1007 = vpop.f32.mrf.mxu0
      %v1008 = vadd.f32 %v414, %v1007
      %v1009 = vpop.f32.mrf.mxu0
      %v1010 = vadd.f32 %v416, %v1009
      %1011 = vmatmul.bf16.gmra.mxu0 %v887
      %v1012 = vpop.f32.mrf.mxu0
      %v1013 = vadd.f32 %v419, %v1012
      %v1014 = vpop.f32.mrf.mxu0
      %v1015 = vadd.f32 %v421, %v1014
      %1016 = vmatmul.bf16.gmra.mxu0 %v888
      %v1017 = vpop.f32.mrf.mxu0
      %v1018 = vadd.f32 %v424, %v1017
      %v1019 = vpop.f32.mrf.mxu0
      %v1020 = vadd.f32 %v426, %v1019
      %1021 = vmatmul.bf16.gmra.mxu0 %v889
      %v1022 = vpop.f32.mrf.mxu0
      %v1023 = vadd.f32 %v429, %v1022
      %v1024 = vpop.f32.mrf.mxu0
      %v1025 = vadd.f32 %v431, %v1024
      %1026 = vmatmul.bf16.gmra.mxu0 %v890
      %v1027 = vpop.f32.mrf.mxu0
      %v1028 = vadd.f32 %v434, %v1027
      %v1029 = vpop.f32.mrf.mxu0
      %v1030 = vadd.f32 %v436, %v1029
      %1031 = vmatmul.bf16.gmra.mxu0 %v891
      %v1032 = vpop.f32.mrf.mxu0
      %v1033 = vadd.f32 %v439, %v1032
      %v1034 = vpop.f32.mrf.mxu0
      %v1035 = vadd.f32 %v441, %v1034
      %1036 = vmatmul.bf16.gmra.mxu0 %v892
      %v1037 = vpop.f32.mrf.mxu0
      %v1038 = vadd.f32 %v444, %v1037
      %v1039 = vpop.f32.mrf.mxu0
      %v1040 = vadd.f32 %v446, %v1039
      %1041 = vmatmul.bf16.gmra.mxu0 %v893
      %v1042 = vpop.f32.mrf.mxu0
      %v1043 = vadd.f32 %v449, %v1042
      %v1044 = vpop.f32.mrf.mxu0
      %v1045 = vadd.f32 %v451, %v1044
      %1046 = vdwg.mxu0
      %v1047 = vtanh.pop %v968
      %v1048 = vtanh.pop %v970
      %v1049 = vtanh.pop %v973
      %v1050 = vtanh.pop %v975
      %v1051 = vtanh.pop %v978
      %v1052 = vtanh.pop %v980
      %v1053 = vtanh.pop %v983
      %v1054 = vtanh.pop %v985
      %v1055 = vtanh.pop %v988
      %v1056 = vtanh.pop %v990
      %v1057 = vtanh.pop %v993
      %v1058 = vtanh.pop %v995
      %v1059 = vtanh.pop %v998
      %v1060 = vtanh.pop %v1000
      %v1061 = vtanh.pop %v1003
      %v1062 = vtanh.pop %v1005
      %v1063 = vtanh.pop %v1008
      %v1064 = vtanh.pop %v1010
      %v1065 = vtanh.pop %v1013
      %v1066 = vtanh.pop %v1015
      %v1067 = vtanh.pop %v1018
      %v1068 = vtanh.pop %v1020
      %v1069 = vtanh.pop %v1023
      %v1070 = vtanh.pop %v1025
      %v1071 = vtanh.pop %v1028
      %v1072 = vtanh.pop %v1030
      %v1073 = vtanh.pop %v1033
      %v1074 = vtanh.pop %v1035
      %v1075 = vtanh.pop %v1038
      %v1076 = vtanh.pop %v1040
      %v1077 = vtanh.pop %v1043
      %v1078 = vtanh.pop %v1045
      %v1079 = vpack.c.bf16 %v734, %v734
      %v1080 = vpack.c.bf16 %v735, %v735
      %v1081 = vpack.c.bf16 %v736, %v736
      %v1082 = vpack.c.bf16 %v737, %v737
      %v1083 = vpack.c.bf16 %v738, %v738
      %v1084 = vpack.c.bf16 %v739, %v739
      %v1085 = vpack.c.bf16 %v740, %v740
      %v1086 = vpack.c.bf16 %v741, %v741
      %v1087 = vpack.c.bf16 %v742, %v742
      %v1088 = vpack.c.bf16 %v743, %v743
      %v1089 = vpack.c.bf16 %v744, %v744
      %v1090 = vpack.c.bf16 %v745, %v745
      %v1091 = vpack.c.bf16 %v746, %v746
      %v1092 = vpack.c.bf16 %v747, %v747
      %v1093 = vpack.c.bf16 %v748, %v748
      %v1094 = vpack.c.bf16 %v749, %v749
      %v1095 = vpack.c.bf16 %v750, %v750
      %v1096 = vpack.c.bf16 %v751, %v751
      %v1097 = vpack.c.bf16 %v752, %v752
      %v1098 = vpack.c.bf16 %v753, %v753
      %v1099 = vpack.c.bf16 %v754, %v754
      %v1100 = vpack.c.bf16 %v755, %v755
      %v1101 = vpack.c.bf16 %v756, %v756
      %v1102 = vpack.c.bf16 %v757, %v757
      %v1103 = vpack.c.bf16 %v758, %v758
      %v1104 = vpack.c.bf16 %v759, %v759
      %v1105 = vpack.c.bf16 %v760, %v760
      %v1106 = vpack.c.bf16 %v761, %v761
      %v1107 = vpack.c.bf16 %v762, %v762
      %v1108 = vpack.c.bf16 %v763, %v763
      %v1109 = vpack.c.bf16 %v764, %v764
      %v1110 = vpack.c.bf16 %v765, %v765
      %1111 = vst [vmem:[#allocation2] sm:$0xf] %v1079
      %1112 = vst [vmem:[#allocation2 + $0x8] sm:$0xf] %v1080
      %1113 = vst [vmem:[#allocation2 + $0x10] sm:$0xf] %v1081
      %1114 = vst [vmem:[#allocation2 + $0x18] sm:$0xf] %v1082
      %1115 = vst [vmem:[#allocation2 + $0x20] sm:$0xf] %v1083
      %1116 = vst [vmem:[#allocation2 + $0x28] sm:$0xf] %v1084
      %1117 = vst [vmem:[#allocation2 + $0x30] sm:$0xf] %v1085
      %1118 = vst [vmem:[#allocation2 + $0x38] sm:$0xf] %v1086
      %1119 = vst [vmem:[#allocation2 + $0x40] sm:$0xf] %v1087
      %1120 = vst [vmem:[#allocation2 + $0x48] sm:$0xf] %v1088
      %1121 = vst [vmem:[#allocation2 + $0x50] sm:$0xf] %v1089
      %1122 = vst [vmem:[#allocation2 + $0x58] sm:$0xf] %v1090
      %1123 = vst [vmem:[#allocation2 + $0x60] sm:$0xf] %v1091
      %1124 = vst [vmem:[#allocation2 + $0x68] sm:$0xf] %v1092
      %1125 = vst [vmem:[#allocation2 + $0x70] sm:$0xf] %v1093
      %1126 = vst [vmem:[#allocation2 + $0x78] sm:$0xf] %v1094
      %1127 = vst [vmem:[#allocation2 + $0x80] sm:$0xf] %v1095
      %1128 = vst [vmem:[#allocation2 + $0x88] sm:$0xf] %v1096
      %1129 = vst [vmem:[#allocation2 + $0x90] sm:$0xf] %v1097
      %1130 = vst [vmem:[#allocation2 + $0x98] sm:$0xf] %v1098
      %1131 = vst [vmem:[#allocation2 + $0xa0] sm:$0xf] %v1099
      %1132 = vst [vmem:[#allocation2 + $0xa8] sm:$0xf] %v1100
      %1133 = vst [vmem:[#allocation2 + $0xb0] sm:$0xf] %v1101
      %1134 = vst [vmem:[#allocation2 + $0xb8] sm:$0xf] %v1102
      %1135 = vst [vmem:[#allocation2 + $0xc0] sm:$0xf] %v1103
      %1136 = vst [vmem:[#allocation2 + $0xc8] sm:$0xf] %v1104
      %1137 = vst [vmem:[#allocation2 + $0xd0] sm:$0xf] %v1105
      %1138 = vst [vmem:[#allocation2 + $0xd8] sm:$0xf] %v1106
      %1139 = vst [vmem:[#allocation2 + $0xe0] sm:$0xf] %v1107
      %1140 = vst [vmem:[#allocation2 + $0xe8] sm:$0xf] %v1108
      %1141 = vst [vmem:[#allocation2 + $0xf0] sm:$0xf] %v1109
      %1142 = vst [vmem:[#allocation2 + $0xf8] sm:$0xf] %v1110
      %v1143 = vpack.c.bf16 %v1047, %v1047
      %v1144 = vpack.c.bf16 %v1048, %v1048
      %v1145 = vpack.c.bf16 %v1049, %v1049
      %v1146 = vpack.c.bf16 %v1050, %v1050
      %v1147 = vpack.c.bf16 %v1051, %v1051
      %v1148 = vpack.c.bf16 %v1052, %v1052
      %v1149 = vpack.c.bf16 %v1053, %v1053
      %v1150 = vpack.c.bf16 %v1054, %v1054
      %v1151 = vpack.c.bf16 %v1055, %v1055
      %v1152 = vpack.c.bf16 %v1056, %v1056
      %v1153 = vpack.c.bf16 %v1057, %v1057
      %v1154 = vpack.c.bf16 %v1058, %v1058
      %v1155 = vpack.c.bf16 %v1059, %v1059
      %v1156 = vpack.c.bf16 %v1060, %v1060
      %v1157 = vpack.c.bf16 %v1061, %v1061
      %v1158 = vpack.c.bf16 %v1062, %v1062
      %v1159 = vpack.c.bf16 %v1063, %v1063
      %v1160 = vpack.c.bf16 %v1064, %v1064
      %v1161 = vpack.c.bf16 %v1065, %v1065
      %v1162 = vpack.c.bf16 %v1066, %v1066
      %v1163 = vpack.c.bf16 %v1067, %v1067
      %v1164 = vpack.c.bf16 %v1068, %v1068
      %v1165 = vpack.c.bf16 %v1069, %v1069
      %v1166 = vpack.c.bf16 %v1070, %v1070
      %v1167 = vpack.c.bf16 %v1071, %v1071
      %v1168 = vpack.c.bf16 %v1072, %v1072
      %v1169 = vpack.c.bf16 %v1073, %v1073
      %v1170 = vpack.c.bf16 %v1074, %v1074
      %v1171 = vpack.c.bf16 %v1075, %v1075
      %v1172 = vpack.c.bf16 %v1076, %v1076
      %v1173 = vpack.c.bf16 %v1077, %v1077
      %v1174 = vpack.c.bf16 %v1078, %v1078
      %1175 = vst [vmem:[#allocation2 + $0x4] sm:$0xf] %v1143
      %1176 = vst [vmem:[#allocation2 + $0xc] sm:$0xf] %v1144
      %1177 = vst [vmem:[#allocation2 + $0x14] sm:$0xf] %v1145
      %1178 = vst [vmem:[#allocation2 + $0x1c] sm:$0xf] %v1146
      %1179 = vst [vmem:[#allocation2 + $0x24] sm:$0xf] %v1147
      %1180 = vst [vmem:[#allocation2 + $0x2c] sm:$0xf] %v1148
      %1181 = vst [vmem:[#allocation2 + $0x34] sm:$0xf] %v1149
      %1182 = vst [vmem:[#allocation2 + $0x3c] sm:$0xf] %v1150
      %1183 = vst [vmem:[#allocation2 + $0x44] sm:$0xf] %v1151
      %1184 = vst [vmem:[#allocation2 + $0x4c] sm:$0xf] %v1152
      %1185 = vst [vmem:[#allocation2 + $0x54] sm:$0xf] %v1153
      %1186 = vst [vmem:[#allocation2 + $0x5c] sm:$0xf] %v1154
      %1187 = vst [vmem:[#allocation2 + $0x64] sm:$0xf] %v1155
      %1188 = vst [vmem:[#allocation2 + $0x6c] sm:$0xf] %v1156
      %1189 = vst [vmem:[#allocation2 + $0x74] sm:$0xf] %v1157
      %1190 = vst [vmem:[#allocation2 + $0x7c] sm:$0xf] %v1158
      %1191 = vst [vmem:[#allocation2 + $0x84] sm:$0xf] %v1159
      %1192 = vst [vmem:[#allocation2 + $0x8c] sm:$0xf] %v1160
      %1193 = vst [vmem:[#allocation2 + $0x94] sm:$0xf] %v1161
      %1194 = vst [vmem:[#allocation2 + $0x9c] sm:$0xf] %v1162
      %1195 = vst [vmem:[#allocation2 + $0xa4] sm:$0xf] %v1163
      %1196 = vst [vmem:[#allocation2 + $0xac] sm:$0xf] %v1164
      %1197 = vst [vmem:[#allocation2 + $0xb4] sm:$0xf] %v1165
      %1198 = vst [vmem:[#allocation2 + $0xbc] sm:$0xf] %v1166
      %1199 = vst [vmem:[#allocation2 + $0xc4] sm:$0xf] %v1167
      %1200 = vst [vmem:[#allocation2 + $0xcc] sm:$0xf] %v1168
      %1201 = vst [vmem:[#allocation2 + $0xd4] sm:$0xf] %v1169
      %1202 = vst [vmem:[#allocation2 + $0xdc] sm:$0xf] %v1170
      %1203 = vst [vmem:[#allocation2 + $0xe4] sm:$0xf] %v1171
      %1204 = vst [vmem:[#allocation2 + $0xec] sm:$0xf] %v1172
      %1205 = vst [vmem:[#allocation2 + $0xf4] sm:$0xf] %v1173
      %1206 = vst [vmem:[#allocation2 + $0xfc] sm:$0xf] %v1174
    $region53: #{tpu_custom_call.1} parent=1 // pred_fallthru
      _
    %v1207 = vld [vmem:[#allocation3] sm:$0xff]
    %v1208 = vld [vmem:[#allocation2] sm:$0xff]
    %v1209 = vld [vmem:[#allocation2 + $0x8] sm:$0xff]
    %v1210 = vld [vmem:[#allocation2 + $0x10] sm:$0xff]
    %v1211 = vld [vmem:[#allocation2 + $0x18] sm:$0xff]
    %v1212 = vld [vmem:[#allocation2 + $0x20] sm:$0xff]
    %v1213 = vld [vmem:[#allocation2 + $0x28] sm:$0xff]
    %v1214 = vld [vmem:[#allocation2 + $0x30] sm:$0xff]
    %v1215 = vld [vmem:[#allocation2 + $0x38] sm:$0xff]
    %v1216 = vld [vmem:[#allocation2 + $0x40] sm:$0xff]
    %v1217 = vld [vmem:[#allocation2 + $0x48] sm:$0xff]
    %v1218 = vld [vmem:[#allocation2 + $0x50] sm:$0xff]
    %v1219 = vld [vmem:[#allocation2 + $0x58] sm:$0xff]
    %v1220 = vld [vmem:[#allocation2 + $0x60] sm:$0xff]
    %v1221 = vld [vmem:[#allocation2 + $0x68] sm:$0xff]
    %v1222 = vld [vmem:[#allocation2 + $0x70] sm:$0xff]
    %v1223 = vld [vmem:[#allocation2 + $0x78] sm:$0xff]
    %v1224 = vld [vmem:[#allocation2 + $0x80] sm:$0xff]
    %v1225 = vld [vmem:[#allocation2 + $0x88] sm:$0xff]
    %v1226 = vld [vmem:[#allocation2 + $0x90] sm:$0xff]
    %v1227 = vld [vmem:[#allocation2 + $0x98] sm:$0xff]
    %v1228 = vld [vmem:[#allocation2 + $0xa0] sm:$0xff]
    %v1229 = vld [vmem:[#allocation2 + $0xa8] sm:$0xff]
    %v1230 = vld [vmem:[#allocation2 + $0xb0] sm:$0xff]
    %v1231 = vld [vmem:[#allocation2 + $0xb8] sm:$0xff]
    %v1232 = vld [vmem:[#allocation2 + $0xc0] sm:$0xff]
    %v1233 = vld [vmem:[#allocation2 + $0xc8] sm:$0xff]
    %v1234 = vld [vmem:[#allocation2 + $0xd0] sm:$0xff]
    %v1235 = vld [vmem:[#allocation2 + $0xd8] sm:$0xff]
    %v1236 = vld [vmem:[#allocation2 + $0xe0] sm:$0xff]
    %v1237 = vld [vmem:[#allocation2 + $0xe8] sm:$0xff]
    %v1238 = vld [vmem:[#allocation2 + $0xf0] sm:$0xff]
    %v1239 = vld [vmem:[#allocation2 + $0xf8] sm:$0xff]
    %v1241 = vunpack.c.l.b16 %v1207
    %v1242 = vunpack.c.h.b16 %v1207
    %v1243 = vpack.c.b16 %v1241, %v1241
    %v1244 = vpack.c.b16 %v1242, %v1242
    %v1279 = vunpack.c.l.b16 %v1208
    %v1280 = vunpack.c.h.b16 %v1208
    %v1281 = vunpack.c.l.b16 %v1209
    %v1282 = vunpack.c.h.b16 %v1209
    %v1283 = vunpack.c.l.b16 %v1210
    %v1284 = vunpack.c.h.b16 %v1210
    %v1285 = vunpack.c.l.b16 %v1211
    %v1286 = vunpack.c.h.b16 %v1211
    %v1287 = vunpack.c.l.b16 %v1212
    %v1288 = vunpack.c.h.b16 %v1212
    %v1289 = vunpack.c.l.b16 %v1213
    %v1290 = vunpack.c.h.b16 %v1213
    %v1291 = vunpack.c.l.b16 %v1214
    %v1292 = vunpack.c.h.b16 %v1214
    %v1293 = vunpack.c.l.b16 %v1215
    %v1294 = vunpack.c.h.b16 %v1215
    %v1295 = vunpack.c.l.b16 %v1216
    %v1296 = vunpack.c.h.b16 %v1216
    %v1297 = vunpack.c.l.b16 %v1217
    %v1298 = vunpack.c.h.b16 %v1217
    %v1299 = vunpack.c.l.b16 %v1218
    %v1300 = vunpack.c.h.b16 %v1218
    %v1301 = vunpack.c.l.b16 %v1219
    %v1302 = vunpack.c.h.b16 %v1219
    %v1303 = vunpack.c.l.b16 %v1220
    %v1304 = vunpack.c.h.b16 %v1220
    %v1305 = vunpack.c.l.b16 %v1221
    %v1306 = vunpack.c.h.b16 %v1221
    %v1307 = vunpack.c.l.b16 %v1222
    %v1308 = vunpack.c.h.b16 %v1222
    %v1309 = vunpack.c.l.b16 %v1223
    %v1310 = vunpack.c.h.b16 %v1223
    %v1311 = vunpack.c.l.b16 %v1224
    %v1312 = vunpack.c.h.b16 %v1224
    %v1313 = vunpack.c.l.b16 %v1225
    %v1314 = vunpack.c.h.b16 %v1225
    %v1315 = vunpack.c.l.b16 %v1226
    %v1316 = vunpack.c.h.b16 %v1226
    %v1317 = vunpack.c.l.b16 %v1227
    %v1318 = vunpack.c.h.b16 %v1227
    %v1319 = vunpack.c.l.b16 %v1228
    %v1320 = vunpack.c.h.b16 %v1228
    %v1321 = vunpack.c.l.b16 %v1229
    %v1322 = vunpack.c.h.b16 %v1229
    %v1323 = vunpack.c.l.b16 %v1230
    %v1324 = vunpack.c.h.b16 %v1230
    %v1325 = vunpack.c.l.b16 %v1231
    %v1326 = vunpack.c.h.b16 %v1231
    %v1327 = vunpack.c.l.b16 %v1232
    %v1328 = vunpack.c.h.b16 %v1232
    %v1329 = vunpack.c.l.b16 %v1233
    %v1330 = vunpack.c.h.b16 %v1233
    %v1331 = vunpack.c.l.b16 %v1234
    %v1332 = vunpack.c.h.b16 %v1234
    %v1333 = vunpack.c.l.b16 %v1235
    %v1334 = vunpack.c.h.b16 %v1235
    %v1335 = vunpack.c.l.b16 %v1236
    %v1336 = vunpack.c.h.b16 %v1236
    %v1337 = vunpack.c.l.b16 %v1237
    %v1338 = vunpack.c.h.b16 %v1237
    %v1339 = vunpack.c.l.b16 %v1238
    %v1340 = vunpack.c.h.b16 %v1238
    %v1341 = vunpack.c.l.b16 %v1239
    %v1342 = vunpack.c.h.b16 %v1239
    %v1343 = vpack.c.b16 %v1281, %v1279
    %v1344 = vpack.c.b16 %v1282, %v1280
    %v1345 = vpack.c.b16 %v1285, %v1283
    %v1346 = vpack.c.b16 %v1286, %v1284
    %v1347 = vpack.c.b16 %v1289, %v1287
    %v1348 = vpack.c.b16 %v1290, %v1288
    %v1349 = vpack.c.b16 %v1293, %v1291
    %v1350 = vpack.c.b16 %v1294, %v1292
    %v1351 = vpack.c.b16 %v1297, %v1295
    %v1352 = vpack.c.b16 %v1298, %v1296
    %v1353 = vpack.c.b16 %v1301, %v1299
    %v1354 = vpack.c.b16 %v1302, %v1300
    %v1355 = vpack.c.b16 %v1305, %v1303
    %v1356 = vpack.c.b16 %v1306, %v1304
    %v1357 = vpack.c.b16 %v1309, %v1307
    %v1358 = vpack.c.b16 %v1310, %v1308
    %v1359 = vpack.c.b16 %v1313, %v1311
    %v1360 = vpack.c.b16 %v1314, %v1312
    %v1361 = vpack.c.b16 %v1317, %v1315
    %v1362 = vpack.c.b16 %v1318, %v1316
    %v1363 = vpack.c.b16 %v1321, %v1319
    %v1364 = vpack.c.b16 %v1322, %v1320
    %v1365 = vpack.c.b16 %v1325, %v1323
    %v1366 = vpack.c.b16 %v1326, %v1324
    %v1367 = vpack.c.b16 %v1329, %v1327
    %v1368 = vpack.c.b16 %v1330, %v1328
    %v1369 = vpack.c.b16 %v1333, %v1331
    %v1370 = vpack.c.b16 %v1334, %v1332
    %v1371 = vpack.c.b16 %v1337, %v1335
    %v1372 = vpack.c.b16 %v1338, %v1336
    %v1373 = vpack.c.b16 %v1341, %v1339
    %v1374 = vpack.c.b16 %v1342, %v1340
    %1407 = vmatpush.bf16.xpose.msra.mxu0 %v1357
    %1408 = vmatpush.bf16.xpose.msra.mxu0 %v1355
    %1409 = vmatpush.bf16.xpose.msra.mxu0 %v1353
    %1410 = vmatpush.bf16.xpose.msra.mxu0 %v1351
    %1411 = vmatpush.bf16.xpose.msra.mxu0 %v1349
    %1412 = vmatpush.bf16.xpose.msra.mxu0 %v1347
    %1413 = vmatpush.bf16.xpose.msra.mxu0 %v1345
    %1414 = vmatpush.bf16.xpose.msra.mxu0 %v1343
    %1415 = vmatmul.bf16.gmra.mxu0 %v1243
    %v1416 = vpop.f32.mrf.mxu0
    %v1417 = vadd.f32 0.0, %v1416
    %v1418 = vpop.f32.mrf.mxu0
    %1419 = vdwg.mxu0
    %1420 = vmatpush.bf16.xpose.msra.mxu0 %v1358
    %1421 = vmatpush.bf16.xpose.msra.mxu0 %v1356
    %1422 = vmatpush.bf16.xpose.msra.mxu0 %v1354
    %1423 = vmatpush.bf16.xpose.msra.mxu0 %v1352
    %1424 = vmatpush.bf16.xpose.msra.mxu0 %v1350
    %1425 = vmatpush.bf16.xpose.msra.mxu0 %v1348
    %1426 = vmatpush.bf16.xpose.msra.mxu0 %v1346
    %1427 = vmatpush.bf16.xpose.msra.mxu0 %v1344
    %1428 = vmatmul.bf16.gmra.mxu0 %v1244
    %v1429 = vpop.f32.mrf.mxu0
    %v1430 = vadd.f32 %v1417, %v1429
    %v1431 = vpop.f32.mrf.mxu0
    %1432 = vdwg.mxu0
    %1433 = vmatpush.bf16.xpose.msra.mxu0 %v1373
    %1434 = vmatpush.bf16.xpose.msra.mxu0 %v1371
    %1435 = vmatpush.bf16.xpose.msra.mxu0 %v1369
    %1436 = vmatpush.bf16.xpose.msra.mxu0 %v1367
    %1437 = vmatpush.bf16.xpose.msra.mxu0 %v1365
    %1438 = vmatpush.bf16.xpose.msra.mxu0 %v1363
    %1439 = vmatpush.bf16.xpose.msra.mxu0 %v1361
    %1440 = vmatpush.bf16.xpose.msra.mxu0 %v1359
    %1441 = vmatmul.bf16.gmra.mxu0 %v1243
    %v1442 = vpop.f32.mrf.mxu0
    %v1443 = vadd.f32 0.0, %v1442
    %v1444 = vpop.f32.mrf.mxu0
    %1445 = vdwg.mxu0
    %1446 = vmatpush.bf16.xpose.msra.mxu0 %v1374
    %1447 = vmatpush.bf16.xpose.msra.mxu0 %v1372
    %1448 = vmatpush.bf16.xpose.msra.mxu0 %v1370
    %1449 = vmatpush.bf16.xpose.msra.mxu0 %v1368
    %1450 = vmatpush.bf16.xpose.msra.mxu0 %v1366
    %1451 = vmatpush.bf16.xpose.msra.mxu0 %v1364
    %1452 = vmatpush.bf16.xpose.msra.mxu0 %v1362
    %1453 = vmatpush.bf16.xpose.msra.mxu0 %v1360
    %1454 = vmatmul.bf16.gmra.mxu0 %v1244
    %v1455 = vpop.f32.mrf.mxu0
    %v1456 = vadd.f32 %v1443, %v1455
    %v1457 = vpop.f32.mrf.mxu0
    %1458 = vdwg.mxu0
    %v1459 = vsub.f32 0.0, %v1430
    %v1460 = vsub.f32 0.0, %v1456
    %v1461 = vmul.f32 %v1459, 1.442695
    %v1462 = vpow.pop %v1461
    %v1463 = vmul.f32 %v1460, 1.442695
    %v1464 = vpow.pop %v1463
    %v1465 = vadd.f32 %v1462, 1.0
    %v1466 = vadd.f32 %v1464, 1.0
    %v1467 = vrcp.pop %v1465
    %v1468 = vmul.f32 %v1465, %v1467
    %v1469 = vsub.f32 1.0, %v1468
    %v1470 = vmul.f32 %v1467, %v1469
    %v1471 = vadd.f32 %v1467, %v1470
    %vm1472 = vweird.f32 %v1465
    %vm1473 = vweird.f32 %v1467
    %vm1474 = vmor %vm1472, %vm1473
    %v1475 = vsel %vm1474, %v1467, %v1471
    %v1476 = vand.u32 2147483647, %v1465
    %vm1477 = vcmp.eq.f32.partialorder %v1476, 8.507059e+37
    %v1478 = vand.u32 %v1465, 2147483648
    %v1479 = vor.u32 1.1754944e-38, %v1478
    %v1480 = vsel %vm1477, %v1479, %v1475
    %v1481 = vmul.f32 1.0, %v1480
    %v1482 = vrcp.pop %v1466
    %v1483 = vmul.f32 %v1466, %v1482
    %v1484 = vsub.f32 1.0, %v1483
    %v1485 = vmul.f32 %v1482, %v1484
    %v1486 = vadd.f32 %v1482, %v1485
    %vm1487 = vweird.f32 %v1466
    %vm1488 = vweird.f32 %v1482
    %vm1489 = vmor %vm1487, %vm1488
    %v1490 = vsel %vm1489, %v1482, %v1486
    %v1491 = vand.u32 2147483647, %v1466
    %vm1492 = vcmp.eq.f32.partialorder %v1491, 8.507059e+37
    %v1493 = vand.u32 %v1466, 2147483648
    %v1494 = vor.u32 1.1754944e-38, %v1493
    %v1495 = vsel %vm1492, %v1494, %v1490
    %v1496 = vmul.f32 1.0, %v1495
    %v1497 = vpack.c.bf16 %v1496, %v1481
    %1498 = vst [vmem:[#allocation11] sm:$0xff] %v1497
    // Predicated region
    $region54: #{tpu_custom_call.1} parent=1 // pred_check
      _
    $region55: #{tpu_custom_call.1} parent=1 // pred_check_branch
      %1500 = sbr.rel (0) target = $region57
    $region56: #{tpu_custom_call.1} parent=1 // pred_region
      %1502 = vsyncadd [#allocation5], 0
      %s1504 = sshll.u32 [#allocation11], 4
      %s1505 = int_to_ptr.vmem [resolvable:$true] %s1504
      %s1506 = sshll.u32 %s8, 4
      %s1507 = int_to_ptr.hbm [resolvable:$true] %s1506
      %1509 = dma.vmem_to_hbm [thread:$0]  %s1505, 128, %s1507, [#allocation5]
    $region57: #{tpu_custom_call.1} parent=1 // pred_fallthru
      _
    // Predicated region
    $region58: #{tpu_custom_call.1} parent=1 // pred_check
      _
    $region59: #{tpu_custom_call.1} parent=1 // pred_check_branch
      %1511 = sbr.rel (0) target = $region61
    $region60: #{tpu_custom_call.1} parent=1 // pred_region
      %1513 = dma.done [#allocation5], 128
    $region61: #{tpu_custom_call.1} parent=1 // pred_fallthru
      _
    %1514 = vsyncpa [#allocation4], 1
    %1515 = vsyncpa [#allocation7], 1
    %1516 = vsyncpa [#allocation10], 1
    %1517 = vsyncpa [#allocation5], 1

</llo_original>
